<compile_context>
chip_gen: v5e
topology: v5e:2x2
jax: 0.10.0
libtpu: 0.0.40
codegen_flags: <defaults>
</compile_context>

<pallas_src>
import functools

import jax
import jax.numpy as jnp
from jax.experimental import pallas as pl
from jax.experimental.pallas import tpu as pltpu

LANE = 128
SUBLANE = 8


def _round_up(x, m):
    return (x + m - 1) // m * m


def _pick_tile(dim, preferred, align):
    """Largest tile <= preferred that divides dim and is `align`-aligned.
    Falls back to the full dim (block == full array extent is always legal)."""
    if dim <= preferred:
        return dim
    for t in range(preferred, 0, -1):
        if dim % t == 0 and t % align == 0:
            return t
    return dim


# ----------------------------------------------------------------------------
# Kernel 1: tiled  out = act(x @ w + b)
#   x:(M,Kp) bf16, w:(Kp,Np) bf16, b:(1,Np) f32, out:(M,Np) (bf16 or f32)
#   grid = (M//tm, Kp//tk), f32 VMEM accumulator over the K axis.
# ----------------------------------------------------------------------------
def _matmul_bias_act_kernel(x_ref, w_ref, b_ref, o_ref, acc_ref, *, apply_relu):
    k = pl.program_id(1)

    @pl.when(k == 0)
    def _init():
        acc_ref[...] = jnp.zeros_like(acc_ref)

    acc_ref[...] += jnp.dot(x_ref[...], w_ref[...],
                            preferred_element_type=jnp.float32)

    @pl.when(k == pl.num_programs(1) - 1)
    def _finalize():
        y = acc_ref[...] + b_ref[...]            # f32 epilogue
        if apply_relu:
            y = jnp.maximum(y, 0.0)
        o_ref[...] = y.astype(o_ref.dtype)


def matmul_bias_act(x, w, b, *, apply_relu, out_dtype, tm_max=512, tk_max=512):
    M, Kp = x.shape
    Kp2, Np = w.shape
    assert Kp == Kp2 and Kp % LANE == 0 and Np % LANE == 0
    tm = _pick_tile(M, tm_max, SUBLANE)
    tk = _pick_tile(Kp, tk_max, LANE)
    grid = (M // tm, Kp // tk)
    kernel = functools.partial(_matmul_bias_act_kernel, apply_relu=apply_relu)
    return pl.pallas_call(
        kernel,
        out_shape=jax.ShapeDtypeStruct((M, Np), out_dtype),
        grid_spec=pltpu.PrefetchScalarGridSpec(
            num_scalar_prefetch=0,
            grid=grid,
            in_specs=[
                pl.BlockSpec((tm, tk), lambda i, k: (i, k)),
                pl.BlockSpec((tk, Np), lambda i, k: (k, 0)),
                pl.BlockSpec((1, Np), lambda i, k: (0, 0)),
            ],
            out_specs=pl.BlockSpec((tm, Np), lambda i, k: (i, 0)),
            scratch_shapes=[pltpu.VMEM((tm, Np), jnp.float32)],
        ),
        compiler_params=pltpu.CompilerParams(
            dimension_semantics=("parallel", "arbitrary"),
            vmem_limit_bytes=32 * 1024 * 1024,
        ),
    )(x, w, b)


# ----------------------------------------------------------------------------
# Kernel 2: fused MLP  out = (relu(x @ w1 + b1)) @ w2 + b2
#   Hidden (tm,128) lives only in the VMEM accumulator; K1 tiled with
#   accumulation, the second (128 x N2p) matmul runs in the finalize branch.
# ----------------------------------------------------------------------------
def _mlp_kernel(x_ref, w1_ref, b1_ref, w2_ref, b2_ref, o_ref, acc_ref):
    k = pl.program_id(1)

    @pl.when(k == 0)
    def _init():
        acc_ref[...] = jnp.zeros_like(acc_ref)

    acc_ref[...] += jnp.dot(x_ref[...], w1_ref[...],
                            preferred_element_type=jnp.float32)

    @pl.when(k == pl.num_programs(1) - 1)
    def _finalize():
        h = jnp.maximum(acc_ref[...] + b1_ref[...], 0.0)     # f32 epilogue
        y = jnp.dot(h.astype(w2_ref.dtype), w2_ref[...],
                    preferred_element_type=jnp.float32) + b2_ref[...]
        o_ref[...] = y.astype(o_ref.dtype)


def mlp_fused(x, w1, b1, w2, b2, *, out_dtype, tm_max=512, tk_max=512):
    M, K1 = x.shape
    K1b, H = w1.shape
    Hb, N2 = w2.shape
    assert K1 == K1b and H == Hb
    assert K1 % LANE == 0 and H % LANE == 0 and N2 % LANE == 0
    tm = _pick_tile(M, tm_max, SUBLANE)
    tk = _pick_tile(K1, tk_max, LANE)
    grid = (M // tm, K1 // tk)
    return pl.pallas_call(
        _mlp_kernel,
        out_shape=jax.ShapeDtypeStruct((M, N2), out_dtype),
        grid_spec=pltpu.PrefetchScalarGridSpec(
            num_scalar_prefetch=0,
            grid=grid,
            in_specs=[
                pl.BlockSpec((tm, tk), lambda i, k: (i, k)),
                pl.BlockSpec((tk, H), lambda i, k: (k, 0)),
                pl.BlockSpec((1, H), lambda i, k: (0, 0)),
                pl.BlockSpec((H, N2), lambda i, k: (0, 0)),
                pl.BlockSpec((1, N2), lambda i, k: (0, 0)),
            ],
            out_specs=pl.BlockSpec((tm, N2), lambda i, k: (i, 0)),
            scratch_shapes=[pltpu.VMEM((tm, H), jnp.float32)],
        ),
        compiler_params=pltpu.CompilerParams(
            dimension_semantics=("parallel", "arbitrary"),
            vmem_limit_bytes=32 * 1024 * 1024,
        ),
    )(x, w1, b1, w2, b2)


# ----------------------------------------------------------------------------
# im2col glue (pure slicing / reshape, fused by XLA) + conv stage wrapper
# ----------------------------------------------------------------------------
def im2col(x_nhwc, kh, kw, stride, pad):
    x = jnp.pad(x_nhwc, ((0, 0), (pad, pad), (pad, pad), (0, 0)))
    B, H, W, C = x.shape
    Ho = (H - kh) // stride + 1
    Wo = (W - kw) // stride + 1
    patches = []
    for i in range(kh):
        for j in range(kw):
            patches.append(
                x[:, i:i + Ho * stride:stride, j:j + Wo * stride:stride, :])
    cols = jnp.concatenate(patches, axis=-1)        # (B,Ho,Wo,kh*kw*C)
    return cols.reshape(B * Ho * Wo, kh * kw * C), (B, Ho, Wo)


def conv2d_relu(x_nhwc, w_mat_p, b_p, cout, *, stride=2, pad=2, ksize=5):
    """x_nhwc: bf16 (B,H,W,Cin); w_mat_p: (Kp, Np) bf16 (pre-packed, padded);
    b_p: (1, Np) f32. Returns bf16 (B, Ho, Wo, cout)."""
    cols, (B, Ho, Wo) = im2col(x_nhwc, ksize, ksize, stride, pad)
    K = cols.shape[1]
    Kp = w_mat_p.shape[0]
    if Kp != K:
        cols = jnp.pad(cols, ((0, 0), (0, Kp - K)))
    y = matmul_bias_act(cols.astype(jnp.bfloat16), w_mat_p, b_p,
                        apply_relu=True, out_dtype=jnp.bfloat16)
    Np = y.shape[1]
    return y.reshape(B, Ho, Wo, Np)[..., :cout]


# ----------------------------------------------------------------------------
# Parameters: PyTorch-layout init + one-time repack into kernel-ready form
# ----------------------------------------------------------------------------
def init_encoder_params(key, in_channels, encoded_space_dim, input_size):
    s = int(input_size * 0.5 ** 3)
    lin_in = s * s * 32
    keys = jax.random.split(key, 10)

    def norm(k, shape, scale=0.05):
        return (scale * jax.random.normal(k, shape)).astype(jnp.float32)

    return {
        "conv1_w": norm(keys[0], (8, in_channels, 5, 5)),
        "conv1_b": norm(keys[1], (8,)),
        "conv2_w": norm(keys[2], (16, 8, 5, 5)),
        "conv2_b": norm(keys[3], (16,)),
        "conv3_w": norm(keys[4], (32, 16, 5, 5)),
        "conv3_b": norm(keys[5], (32,)),
        "lin1_w": norm(keys[6], (128, lin_in)),   # PyTorch (out, in)
        "lin1_b": norm(keys[7], (128,)),
        "lin2_w": norm(keys[8], (encoded_space_dim, 128)),
        "lin2_b": norm(keys[9], (encoded_space_dim,)),
    }


def _prep_conv(w_oihw, b_o):
    Cout, Cin, KH, KW = w_oihw.shape
    K = KH * KW * Cin
    Kp = _round_up(K, LANE)
    Np = _round_up(Cout, LANE)
    # Reorder so the K axis matches im2col's (kh, kw, cin) ordering.
    w_mat = jnp.transpose(w_oihw, (2, 3, 1, 0)).reshape(K, Cout)
    w_mat = jnp.pad(w_mat, ((0, Kp - K), (0, Np - Cout))).astype(jnp.bfloat16)
    b = jnp.pad(b_o, (0, Np - Cout)).reshape(1, Np).astype(jnp.float32)
    return w_mat, b


def prepare_encoder_params(params, input_size):
    """One-time repack: bf16, lane-dense (N padded to 128), K padded to 128,
    linear weights pre-transposed to (in,out), lin1 input columns permuted to
    NHWC flatten order so no runtime NHWC->NCHW transpose is needed."""
    s = int(input_size * 0.5 ** 3)
    lin_in = s * s * 32

    c1_w, c1_b = _prep_conv(params["conv1_w"], params["conv1_b"])
    c2_w, c2_b = _prep_conv(params["conv2_w"], params["conv2_b"])
    c3_w, c3_b = _prep_conv(params["conv3_w"], params["conv3_b"])

    # lin1: (out, C*H*W) -> columns reordered to (H, W, C) -> (in, out), pad K.
    l1 = params["lin1_w"].reshape(128, 32, s, s)
    l1 = jnp.transpose(l1, (0, 2, 3, 1)).reshape(128, lin_in)
    l1 = jnp.transpose(l1, (1, 0))
    K1p = _round_up(lin_in, LANE)
    l1 = jnp.pad(l1, ((0, K1p - lin_in), (0, 0))).astype(jnp.bfloat16)
    l1b = params["lin1_b"].reshape(1, 128).astype(jnp.float32)

    enc = params["lin2_w"].shape[0]
    N2p = _round_up(enc, LANE)
    l2 = jnp.transpose(params["lin2_w"], (1, 0))            # (128, enc)
    l2 = jnp.pad(l2, ((0, 0), (0, N2p - enc))).astype(jnp.bfloat16)
    l2b = jnp.pad(params["lin2_b"], (0, N2p - enc)).reshape(1, N2p)
    l2b = l2b.astype(jnp.float32)

    return {
        "c1_w": c1_w, "c1_b": c1_b,
        "c2_w": c2_w, "c2_b": c2_b,
        "c3_w": c3_w, "c3_b": c3_b,
        "l1_w": l1, "l1_b": l1b,
        "l2_w": l2, "l2_b": l2b,
    }


# ----------------------------------------------------------------------------
# Forward pass (matches the PyTorch Encoder semantics)
# ----------------------------------------------------------------------------
def encoder_forward(prep, x_nchw, encoded_space_dim):
    # NCHW (PyTorch) -> NHWC for conv compute; bf16 operands for the MXU.
    x = jnp.transpose(x_nchw, (0, 2, 3, 1)).astype(jnp.bfloat16)

    x = conv2d_relu(x, prep["c1_w"], prep["c1_b"], 8)
    x = conv2d_relu(x, prep["c2_w"], prep["c2_b"], 16)
    x = conv2d_relu(x, prep["c3_w"], prep["c3_b"], 32)

    # NHWC flatten (lin1 weight columns were permuted at prep time to match
    # PyTorch's NCHW flatten order exactly).
    B = x.shape[0]
    x = x.reshape(B, -1)
    K1p = prep["l1_w"].shape[0]
    if x.shape[1] != K1p:
        x = jnp.pad(x, ((0, 0), (0, K1p - x.shape[1])))

    y = mlp_fused(x.astype(jnp.bfloat16), prep["l1_w"], prep["l1_b"],
                  prep["l2_w"], prep["l2_b"], out_dtype=jnp.float32)
    return y[:, :encoded_space_dim]


if __name__ == "__main__":
    in_channels = 4
    input_size = 16
    encoded_space_dim = 32
    batch = 2

    key = jax.random.PRNGKey(0)
    k_params, k_x = jax.random.split(key)
    params = init_encoder_params(k_params, in_channels, encoded_space_dim,
                                 input_size)
    prep = prepare_encoder_params(params, input_size)
    x = jax.random.normal(
        k_x, (batch, in_channels, input_size, input_size), dtype=jnp.float32)

    fwd = jax.jit(functools.partial(encoder_forward,
                                    encoded_space_dim=encoded_space_dim))
    out = jax.block_until_ready(fwd(prep, x))
    assert out.shape == (batch, encoded_space_dim), out.shape
    print("KERNEL_OK")
</pallas_src>

<mosaic_0001>
module attributes {stable_mosaic.version = 11 : i64} {
  func.func @_matmul_bias_act_kernel(%arg0: i32, %arg1: i32, %arg2: memref<128x128xbf16, #tpu.memory_space<vmem>>, %arg3: memref<128x128xbf16, #tpu.memory_space<vmem>>, %arg4: memref<1x128xf32, #tpu.memory_space<vmem>>, %arg5: memref<128x128xbf16, #tpu.memory_space<vmem>>, %arg6: memref<128x128xf32, #tpu.memory_space<vmem>>) attributes {dimension_semantics = [#tpu.dimension_semantics<parallel>, #tpu.dimension_semantics<arbitrary>], iteration_bounds = array<i64: 1, 1>, scalar_prefetch = 0 : i64, scratch_operands = 1 : i64, tpu.core_type = #tpu.core_type<tc>, window_params = [{transform_indices = @transform_0, window_bounds = array<i64: 128, 128>}, {transform_indices = @transform_1, window_bounds = array<i64: 128, 128>}, {pipeline_mode = #tpu.pipeline_mode<synchronous>, transform_indices = @transform_2, window_bounds = array<i64: 1, 128>}, {transform_indices = @transform_3, window_bounds = array<i64: 128, 128>}]} {
    %c0_i32 = arith.constant 0 : i32
    %0 = arith.cmpi eq, %arg1, %c0_i32 : i32
    %1 = arith.extui %0 : i1 to i32
    %c0_i32_0 = arith.constant 0 : i32
    %2 = arith.cmpi ne, %1, %c0_i32_0 : i32
    scf.if %2 {
      %cst_10 = arith.constant 0.000000e+00 : f32
      %12 = vector.broadcast %cst_10 : f32 to vector<128x128xf32>
      %c0_11 = arith.constant 0 : index
      %c0_12 = arith.constant 0 : index
      %13 = vector.load %arg6[%c0_11, %c0_12] : memref<128x128xf32, #tpu.memory_space<vmem>>, vector<128x128xf32>
      tpu.vector_store %arg6[%c0_11, %c0_12], %12 {strides = array<i32>} : memref<128x128xf32, #tpu.memory_space<vmem>>, vector<128x128xf32>,
    } else {
    }
    %c0 = arith.constant 0 : index
    %c0_1 = arith.constant 0 : index
    %3 = vector.load %arg6[%c0, %c0_1] : memref<128x128xf32, #tpu.memory_space<vmem>>, vector<128x128xf32>
    %c0_2 = arith.constant 0 : index
    %c0_3 = arith.constant 0 : index
    %4 = vector.load %arg2[%c0_2, %c0_3] : memref<128x128xbf16, #tpu.memory_space<vmem>>, vector<128x128xbf16>
    %c0_4 = arith.constant 0 : index
    %c0_5 = arith.constant 0 : index
    %5 = vector.load %arg3[%c0_4, %c0_5] : memref<128x128xbf16, #tpu.memory_space<vmem>>, vector<128x128xbf16>
    %cst = arith.constant dense<0.000000e+00> : vector<128x128xf32>
    %6 = tpu.matmul %4, %5, %cst {dimension_numbers = #tpu.dot_dimension_numbers<[1], [0], [0], [1], [0, 0, 1, 1], [], []>} : vector<128x128xbf16>, vector<128x128xbf16>, vector<128x128xf32> -> vector<128x128xf32>
    %7 = arith.addf %3, %6 : vector<128x128xf32>
    %c0_6 = arith.constant 0 : index
    %c0_7 = arith.constant 0 : index
    %8 = vector.load %arg6[%c0_6, %c0_7] : memref<128x128xf32, #tpu.memory_space<vmem>>, vector<128x128xf32>
    tpu.vector_store %arg6[%c0_6, %c0_7], %7 {strides = array<i32>} : memref<128x128xf32, #tpu.memory_space<vmem>>, vector<128x128xf32>,
    %c0_i32_8 = arith.constant 0 : i32
    %9 = arith.cmpi eq, %arg1, %c0_i32_8 : i32
    %10 = arith.extui %9 : i1 to i32
    %c0_i32_9 = arith.constant 0 : i32
    %11 = arith.cmpi ne, %10, %c0_i32_9 : i32
    scf.if %11 {
      %c0_10 = arith.constant 0 : index
      %c0_11 = arith.constant 0 : index
      %12 = vector.load %arg6[%c0_10, %c0_11] : memref<128x128xf32, #tpu.memory_space<vmem>>, vector<128x128xf32>
      %c0_12 = arith.constant 0 : index
      %c0_13 = arith.constant 0 : index
      %13 = vector.load %arg4[%c0_12, %c0_13] : memref<1x128xf32, #tpu.memory_space<vmem>>, vector<1x128xf32>
      %14 = vector.broadcast %13 : vector<1x128xf32> to vector<128x128xf32>
      %15 = arith.addf %12, %14 : vector<128x128xf32>
      %cst_14 = arith.constant 0.000000e+00 : f32
      %16 = vector.broadcast %cst_14 : f32 to vector<128x128xf32>
      %17 = arith.maximumf %15, %16 : vector<128x128xf32>
      %18 = arith.truncf %17 : vector<128x128xf32> to vector<128x128xbf16>
      %c0_15 = arith.constant 0 : index
      %c0_16 = arith.constant 0 : index
      %19 = vector.load %arg5[%c0_15, %c0_16] : memref<128x128xbf16, #tpu.memory_space<vmem>>, vector<128x128xbf16>
      tpu.vector_store %arg5[%c0_15, %c0_16], %18 {strides = array<i32>} : memref<128x128xbf16, #tpu.memory_space<vmem>>, vector<128x128xbf16>,
    } else {
    }
    return
  }
  func.func @transform_0(%arg0: i32, %arg1: i32) -> (i32, i32) {
    %c0_i32 = arith.constant 0 : i32
    return %arg0, %arg1 : i32, i32
  }
  func.func @transform_1(%arg0: i32, %arg1: i32) -> (i32, i32) {
    %c0_i32 = arith.constant 0 : i32
    %c0_i32_0 = arith.constant 0 : i32
    return %arg1, %c0_i32 : i32, i32
  }
  func.func @transform_2(%arg0: i32, %arg1: i32) -> (i32, i32) {
    %c0_i32 = arith.constant 0 : i32
    %c0_i32_0 = arith.constant 0 : i32
    %c0_i32_1 = arith.constant 0 : i32
    return %c0_i32, %c0_i32_0 : i32, i32
  }
  func.func @transform_3(%arg0: i32, %arg1: i32) -> (i32, i32) {
    %c0_i32 = arith.constant 0 : i32
    %c0_i32_0 = arith.constant 0 : i32
    return %arg0, %c0_i32 : i32, i32
  }
}

module attributes {stable_mosaic.version = 11 : i64} {
  func.func @_matmul_bias_act_kernel(%arg0: i32, %arg1: i32, %arg2: memref<32x256xbf16, #tpu.memory_space<vmem>>, %arg3: memref<256x128xbf16, #tpu.memory_space<vmem>>, %arg4: memref<1x128xf32, #tpu.memory_space<vmem>>, %arg5: memref<32x128xbf16, #tpu.memory_space<vmem>>, %arg6: memref<32x128xf32, #tpu.memory_space<vmem>>) attributes {dimension_semantics = [#tpu.dimension_semantics<parallel>, #tpu.dimension_semantics<arbitrary>], iteration_bounds = array<i64: 1, 1>, scalar_prefetch = 0 : i64, scratch_operands = 1 : i64, tpu.core_type = #tpu.core_type<tc>, window_params = [{transform_indices = @transform_0, window_bounds = array<i64: 32, 256>}, {transform_indices = @transform_1, window_bounds = array<i64: 256, 128>}, {pipeline_mode = #tpu.pipeline_mode<synchronous>, transform_indices = @transform_2, window_bounds = array<i64: 1, 128>}, {transform_indices = @transform_3, window_bounds = array<i64: 32, 128>}]} {
    %c0_i32 = arith.constant 0 : i32
    %0 = arith.cmpi eq, %arg1, %c0_i32 : i32
    %1 = arith.extui %0 : i1 to i32
    %c0_i32_0 = arith.constant 0 : i32
    %2 = arith.cmpi ne, %1, %c0_i32_0 : i32
    scf.if %2 {
      %cst_10 = arith.constant 0.000000e+00 : f32
      %12 = vector.broadcast %cst_10 : f32 to vector<32x128xf32>
      %c0_11 = arith.constant 0 : index
      %c0_12 = arith.constant 0 : index
      %13 = vector.load %arg6[%c0_11, %c0_12] : memref<32x128xf32, #tpu.memory_space<vmem>>, vector<32x128xf32>
      tpu.vector_store %arg6[%c0_11, %c0_12], %12 {strides = array<i32>} : memref<32x128xf32, #tpu.memory_space<vmem>>, vector<32x128xf32>,
    } else {
    }
    %c0 = arith.constant 0 : index
    %c0_1 = arith.constant 0 : index
    %3 = vector.load %arg6[%c0, %c0_1] : memref<32x128xf32, #tpu.memory_space<vmem>>, vector<32x128xf32>
    %c0_2 = arith.constant 0 : index
    %c0_3 = arith.constant 0 : index
    %4 = vector.load %arg2[%c0_2, %c0_3] : memref<32x256xbf16, #tpu.memory_space<vmem>>, vector<32x256xbf16>
    %c0_4 = arith.constant 0 : index
    %c0_5 = arith.constant 0 : index
    %5 = vector.load %arg3[%c0_4, %c0_5] : memref<256x128xbf16, #tpu.memory_space<vmem>>, vector<256x128xbf16>
    %cst = arith.constant dense<0.000000e+00> : vector<32x128xf32>
    %6 = tpu.matmul %4, %5, %cst {dimension_numbers = #tpu.dot_dimension_numbers<[1], [0], [0], [1], [0, 0, 1, 1], [], []>} : vector<32x256xbf16>, vector<256x128xbf16>, vector<32x128xf32> -> vector<32x128xf32>
    %7 = arith.addf %3, %6 : vector<32x128xf32>
    %c0_6 = arith.constant 0 : index
    %c0_7 = arith.constant 0 : index
    %8 = vector.load %arg6[%c0_6, %c0_7] : memref<32x128xf32, #tpu.memory_space<vmem>>, vector<32x128xf32>
    tpu.vector_store %arg6[%c0_6, %c0_7], %7 {strides = array<i32>} : memref<32x128xf32, #tpu.memory_space<vmem>>, vector<32x128xf32>,
    %c0_i32_8 = arith.constant 0 : i32
    %9 = arith.cmpi eq, %arg1, %c0_i32_8 : i32
    %10 = arith.extui %9 : i1 to i32
    %c0_i32_9 = arith.constant 0 : i32
    %11 = arith.cmpi ne, %10, %c0_i32_9 : i32
    scf.if %11 {
      %c0_10 = arith.constant 0 : index
      %c0_11 = arith.constant 0 : index
      %12 = vector.load %arg6[%c0_10, %c0_11] : memref<32x128xf32, #tpu.memory_space<vmem>>, vector<32x128xf32>
      %c0_12 = arith.constant 0 : index
      %c0_13 = arith.constant 0 : index
      %13 = vector.load %arg4[%c0_12, %c0_13] : memref<1x128xf32, #tpu.memory_space<vmem>>, vector<1x128xf32>
      %14 = vector.broadcast %13 : vector<1x128xf32> to vector<32x128xf32>
      %15 = arith.addf %12, %14 : vector<32x128xf32>
      %cst_14 = arith.constant 0.000000e+00 : f32
      %16 = vector.broadcast %cst_14 : f32 to vector<32x128xf32>
      %17 = arith.maximumf %15, %16 : vector<32x128xf32>
      %18 = arith.truncf %17 : vector<32x128xf32> to vector<32x128xbf16>
      %c0_15 = arith.constant 0 : index
      %c0_16 = arith.constant 0 : index
      %19 = vector.load %arg5[%c0_15, %c0_16] : memref<32x128xbf16, #tpu.memory_space<vmem>>, vector<32x128xbf16>
      tpu.vector_store %arg5[%c0_15, %c0_16], %18 {strides = array<i32>} : memref<32x128xbf16, #tpu.memory_space<vmem>>, vector<32x128xbf16>,
    } else {
    }
    return
  }
  func.func @transform_0(%arg0: i32, %arg1: i32) -> (i32, i32) {
    %c0_i32 = arith.constant 0 : i32
    return %arg0, %arg1 : i32, i32
  }
  func.func @transform_1(%arg0: i32, %arg1: i32) -> (i32, i32) {
    %c0_i32 = arith.constant 0 : i32
    %c0_i32_0 = arith.constant 0 : i32
    return %arg1, %c0_i32 : i32, i32
  }
  func.func @transform_2(%arg0: i32, %arg1: i32) -> (i32, i32) {
    %c0_i32 = arith.constant 0 : i32
    %c0_i32_0 = arith.constant 0 : i32
    %c0_i32_1 = arith.constant 0 : i32
    return %c0_i32, %c0_i32_0 : i32, i32
  }
  func.func @transform_3(%arg0: i32, %arg1: i32) -> (i32, i32) {
    %c0_i32 = arith.constant 0 : i32
    %c0_i32_0 = arith.constant 0 : i32
    return %arg0, %c0_i32 : i32, i32
  }
}

module attributes {stable_mosaic.version = 11 : i64} {
  func.func @_matmul_bias_act_kernel(%arg0: i32, %arg1: i32, %arg2: memref<8x512xbf16, #tpu.memory_space<vmem>>, %arg3: memref<512x128xbf16, #tpu.memory_space<vmem>>, %arg4: memref<1x128xf32, #tpu.memory_space<vmem>>, %arg5: memref<8x128xbf16, #tpu.memory_space<vmem>>, %arg6: memref<8x128xf32, #tpu.memory_space<vmem>>) attributes {dimension_semantics = [#tpu.dimension_semantics<parallel>, #tpu.dimension_semantics<arbitrary>], iteration_bounds = array<i64: 1, 1>, scalar_prefetch = 0 : i64, scratch_operands = 1 : i64, tpu.core_type = #tpu.core_type<tc>, window_params = [{transform_indices = @transform_0, window_bounds = array<i64: 8, 512>}, {transform_indices = @transform_1, window_bounds = array<i64: 512, 128>}, {pipeline_mode = #tpu.pipeline_mode<synchronous>, transform_indices = @transform_2, window_bounds = array<i64: 1, 128>}, {transform_indices = @transform_3, window_bounds = array<i64: 8, 128>}]} {
    %c0_i32 = arith.constant 0 : i32
    %0 = arith.cmpi eq, %arg1, %c0_i32 : i32
    %1 = arith.extui %0 : i1 to i32
    %c0_i32_0 = arith.constant 0 : i32
    %2 = arith.cmpi ne, %1, %c0_i32_0 : i32
    scf.if %2 {
      %cst_10 = arith.constant 0.000000e+00 : f32
      %12 = vector.broadcast %cst_10 : f32 to vector<8x128xf32>
      %c0_11 = arith.constant 0 : index
      %c0_12 = arith.constant 0 : index
      %13 = vector.load %arg6[%c0_11, %c0_12] : memref<8x128xf32, #tpu.memory_space<vmem>>, vector<8x128xf32>
      tpu.vector_store %arg6[%c0_11, %c0_12], %12 {strides = array<i32>} : memref<8x128xf32, #tpu.memory_space<vmem>>, vector<8x128xf32>,
    } else {
    }
    %c0 = arith.constant 0 : index
    %c0_1 = arith.constant 0 : index
    %3 = vector.load %arg6[%c0, %c0_1] : memref<8x128xf32, #tpu.memory_space<vmem>>, vector<8x128xf32>
    %c0_2 = arith.constant 0 : index
    %c0_3 = arith.constant 0 : index
    %4 = vector.load %arg2[%c0_2, %c0_3] : memref<8x512xbf16, #tpu.memory_space<vmem>>, vector<8x512xbf16>
    %c0_4 = arith.constant 0 : index
    %c0_5 = arith.constant 0 : index
    %5 = vector.load %arg3[%c0_4, %c0_5] : memref<512x128xbf16, #tpu.memory_space<vmem>>, vector<512x128xbf16>
    %cst = arith.constant dense<0.000000e+00> : vector<8x128xf32>
    %6 = tpu.matmul %4, %5, %cst {dimension_numbers = #tpu.dot_dimension_numbers<[1], [0], [0], [1], [0, 0, 1, 1], [], []>} : vector<8x512xbf16>, vector<512x128xbf16>, vector<8x128xf32> -> vector<8x128xf32>
    %7 = arith.addf %3, %6 : vector<8x128xf32>
    %c0_6 = arith.constant 0 : index
    %c0_7 = arith.constant 0 : index
    %8 = vector.load %arg6[%c0_6, %c0_7] : memref<8x128xf32, #tpu.memory_space<vmem>>, vector<8x128xf32>
    tpu.vector_store %arg6[%c0_6, %c0_7], %7 {strides = array<i32>} : memref<8x128xf32, #tpu.memory_space<vmem>>, vector<8x128xf32>,
    %c0_i32_8 = arith.constant 0 : i32
    %9 = arith.cmpi eq, %arg1, %c0_i32_8 : i32
    %10 = arith.extui %9 : i1 to i32
    %c0_i32_9 = arith.constant 0 : i32
    %11 = arith.cmpi ne, %10, %c0_i32_9 : i32
    scf.if %11 {
      %c0_10 = arith.constant 0 : index
      %c0_11 = arith.constant 0 : index
      %12 = vector.load %arg6[%c0_10, %c0_11] : memref<8x128xf32, #tpu.memory_space<vmem>>, vector<8x128xf32>
      %c0_12 = arith.constant 0 : index
      %c0_13 = arith.constant 0 : index
      %13 = vector.load %arg4[%c0_12, %c0_13] : memref<1x128xf32, #tpu.memory_space<vmem>>, vector<1x128xf32>
      %14 = vector.broadcast %13 : vector<1x128xf32> to vector<8x128xf32>
      %15 = arith.addf %12, %14 : vector<8x128xf32>
      %cst_14 = arith.constant 0.000000e+00 : f32
      %16 = vector.broadcast %cst_14 : f32 to vector<8x128xf32>
      %17 = arith.maximumf %15, %16 : vector<8x128xf32>
      %18 = arith.truncf %17 : vector<8x128xf32> to vector<8x128xbf16>
      %c0_15 = arith.constant 0 : index
      %c0_16 = arith.constant 0 : index
      %19 = vector.load %arg5[%c0_15, %c0_16] : memref<8x128xbf16, #tpu.memory_space<vmem>>, vector<8x128xbf16>
      tpu.vector_store %arg5[%c0_15, %c0_16], %18 {strides = array<i32>} : memref<8x128xbf16, #tpu.memory_space<vmem>>, vector<8x128xbf16>,
    } else {
    }
    return
  }
  func.func @transform_0(%arg0: i32, %arg1: i32) -> (i32, i32) {
    %c0_i32 = arith.constant 0 : i32
    return %arg0, %arg1 : i32, i32
  }
  func.func @transform_1(%arg0: i32, %arg1: i32) -> (i32, i32) {
    %c0_i32 = arith.constant 0 : i32
    %c0_i32_0 = arith.constant 0 : i32
    return %arg1, %c0_i32 : i32, i32
  }
  func.func @transform_2(%arg0: i32, %arg1: i32) -> (i32, i32) {
    %c0_i32 = arith.constant 0 : i32
    %c0_i32_0 = arith.constant 0 : i32
    %c0_i32_1 = arith.constant 0 : i32
    return %c0_i32, %c0_i32_0 : i32, i32
  }
  func.func @transform_3(%arg0: i32, %arg1: i32) -> (i32, i32) {
    %c0_i32 = arith.constant 0 : i32
    %c0_i32_0 = arith.constant 0 : i32
    return %arg0, %c0_i32 : i32, i32
  }
}

module attributes {stable_mosaic.version = 11 : i64} {
  func.func @_mlp_kernel(%arg0: i32, %arg1: i32, %arg2: memref<2x128xbf16, #tpu.memory_space<vmem>>, %arg3: memref<128x128xbf16, #tpu.memory_space<vmem>>, %arg4: memref<1x128xf32, #tpu.memory_space<vmem>>, %arg5: memref<128x128xbf16, #tpu.memory_space<vmem>>, %arg6: memref<1x128xf32, #tpu.memory_space<vmem>>, %arg7: memref<2x128xf32, #tpu.memory_space<vmem>>, %arg8: memref<2x128xf32, #tpu.memory_space<vmem>>) attributes {dimension_semantics = [#tpu.dimension_semantics<parallel>, #tpu.dimension_semantics<arbitrary>], iteration_bounds = array<i64: 1, 1>, scalar_prefetch = 0 : i64, scratch_operands = 1 : i64, tpu.core_type = #tpu.core_type<tc>, window_params = [{transform_indices = @transform_0, window_bounds = array<i64: 2, 128>}, {transform_indices = @transform_1, window_bounds = array<i64: 128, 128>}, {pipeline_mode = #tpu.pipeline_mode<synchronous>, transform_indices = @transform_2, window_bounds = array<i64: 1, 128>}, {pipeline_mode = #tpu.pipeline_mode<synchronous>, transform_indices = @transform_3, window_bounds = array<i64: 128, 128>}, {pipeline_mode = #tpu.pipeline_mode<synchronous>, transform_indices = @transform_4, window_bounds = array<i64: 1, 128>}, {transform_indices = @transform_5, window_bounds = array<i64: 2, 128>}]} {
    %c0_i32 = arith.constant 0 : i32
    %0 = arith.cmpi eq, %arg1, %c0_i32 : i32
    %1 = arith.extui %0 : i1 to i32
    %c0_i32_0 = arith.constant 0 : i32
    %2 = arith.cmpi ne, %1, %c0_i32_0 : i32
    scf.if %2 {
      %cst_10 = arith.constant 0.000000e+00 : f32
      %12 = vector.broadcast %cst_10 : f32 to vector<2x128xf32>
      %c0_11 = arith.constant 0 : index
      %c0_12 = arith.constant 0 : index
      %13 = vector.load %arg8[%c0_11, %c0_12] : memref<2x128xf32, #tpu.memory_space<vmem>>, vector<2x128xf32>
      tpu.vector_store %arg8[%c0_11, %c0_12], %12 {strides = array<i32>} : memref<2x128xf32, #tpu.memory_space<vmem>>, vector<2x128xf32>,
    } else {
    }
    %c0 = arith.constant 0 : index
    %c0_1 = arith.constant 0 : index
    %3 = vector.load %arg8[%c0, %c0_1] : memref<2x128xf32, #tpu.memory_space<vmem>>, vector<2x128xf32>
    %c0_2 = arith.constant 0 : index
    %c0_3 = arith.constant 0 : index
    %4 = vector.load %arg2[%c0_2, %c0_3] : memref<2x128xbf16, #tpu.memory_space<vmem>>, vector<2x128xbf16>
    %c0_4 = arith.constant 0 : index
    %c0_5 = arith.constant 0 : index
    %5 = vector.load %arg3[%c0_4, %c0_5] : memref<128x128xbf16, #tpu.memory_space<vmem>>, vector<128x128xbf16>
    %cst = arith.constant dense<0.000000e+00> : vector<2x128xf32>
    %6 = tpu.matmul %4, %5, %cst {dimension_numbers = #tpu.dot_dimension_numbers<[1], [0], [0], [1], [0, 0, 1, 1], [], []>} : vector<2x128xbf16>, vector<128x128xbf16>, vector<2x128xf32> -> vector<2x128xf32>
    %7 = arith.addf %3, %6 : vector<2x128xf32>
    %c0_6 = arith.constant 0 : index
    %c0_7 = arith.constant 0 : index
    %8 = vector.load %arg8[%c0_6, %c0_7] : memref<2x128xf32, #tpu.memory_space<vmem>>, vector<2x128xf32>
    tpu.vector_store %arg8[%c0_6, %c0_7], %7 {strides = array<i32>} : memref<2x128xf32, #tpu.memory_space<vmem>>, vector<2x128xf32>,
    %c0_i32_8 = arith.constant 0 : i32
    %9 = arith.cmpi eq, %arg1, %c0_i32_8 : i32
    %10 = arith.extui %9 : i1 to i32
    %c0_i32_9 = arith.constant 0 : i32
    %11 = arith.cmpi ne, %10, %c0_i32_9 : i32
    scf.if %11 {
      %c0_10 = arith.constant 0 : index
      %c0_11 = arith.constant 0 : index
      %12 = vector.load %arg8[%c0_10, %c0_11] : memref<2x128xf32, #tpu.memory_space<vmem>>, vector<2x128xf32>
      %c0_12 = arith.constant 0 : index
      %c0_13 = arith.constant 0 : index
      %13 = vector.load %arg4[%c0_12, %c0_13] : memref<1x128xf32, #tpu.memory_space<vmem>>, vector<1x128xf32>
      %14 = vector.broadcast %13 : vector<1x128xf32> to vector<2x128xf32>
      %15 = arith.addf %12, %14 : vector<2x128xf32>
      %cst_14 = arith.constant 0.000000e+00 : f32
      %16 = vector.broadcast %cst_14 : f32 to vector<2x128xf32>
      %17 = arith.maximumf %15, %16 : vector<2x128xf32>
      %18 = arith.truncf %17 : vector<2x128xf32> to vector<2x128xbf16>
      %c0_15 = arith.constant 0 : index
      %c0_16 = arith.constant 0 : index
      %19 = vector.load %arg5[%c0_15, %c0_16] : memref<128x128xbf16, #tpu.memory_space<vmem>>, vector<128x128xbf16>
      %cst_17 = arith.constant dense<0.000000e+00> : vector<2x128xf32>
      %20 = tpu.matmul %18, %19, %cst_17 {dimension_numbers = #tpu.dot_dimension_numbers<[1], [0], [0], [1], [0, 0, 1, 1], [], []>} : vector<2x128xbf16>, vector<128x128xbf16>, vector<2x128xf32> -> vector<2x128xf32>
      %c0_18 = arith.constant 0 : index
      %c0_19 = arith.constant 0 : index
      %21 = vector.load %arg6[%c0_18, %c0_19] : memref<1x128xf32, #tpu.memory_space<vmem>>, vector<1x128xf32>
      %22 = vector.broadcast %21 : vector<1x128xf32> to vector<2x128xf32>
      %23 = arith.addf %20, %22 : vector<2x128xf32>
      %c0_20 = arith.constant 0 : index
      %c0_21 = arith.constant 0 : index
      %24 = vector.load %arg7[%c0_20, %c0_21] : memref<2x128xf32, #tpu.memory_space<vmem>>, vector<2x128xf32>
      tpu.vector_store %arg7[%c0_20, %c0_21], %23 {strides = array<i32>} : memref<2x128xf32, #tpu.memory_space<vmem>>, vector<2x128xf32>,
    } else {
    }
    return
  }
  func.func @transform_0(%arg0: i32, %arg1: i32) -> (i32, i32) {
    %c0_i32 = arith.constant 0 : i32
    return %arg0, %arg1 : i32, i32
  }
  func.func @transform_1(%arg0: i32, %arg1: i32) -> (i32, i32) {
    %c0_i32 = arith.constant 0 : i32
    %c0_i32_0 = arith.constant 0 : i32
    return %arg1, %c0_i32 : i32, i32
  }
  func.func @transform_2(%arg0: i32, %arg1: i32) -> (i32, i32) {
    %c0_i32 = arith.constant 0 : i32
    %c0_i32_0 = arith.constant 0 : i32
    %c0_i32_1 = arith.constant 0 : i32
    return %c0_i32, %c0_i32_0 : i32, i32
  }
  func.func @transform_3(%arg0: i32, %arg1: i32) -> (i32, i32) {
    %c0_i32 = arith.constant 0 : i32
    %c0_i32_0 = arith.constant 0 : i32
    %c0_i32_1 = arith.constant 0 : i32
    return %c0_i32, %c0_i32_0 : i32, i32
  }
  func.func @transform_4(%arg0: i32, %arg1: i32) -> (i32, i32) {
    %c0_i32 = arith.constant 0 : i32
    %c0_i32_0 = arith.constant 0 : i32
    %c0_i32_1 = arith.constant 0 : i32
    return %c0_i32, %c0_i32_0 : i32, i32
  }
  func.func @transform_5(%arg0: i32, %arg1: i32) -> (i32, i32) {
    %c0_i32 = arith.constant 0 : i32
    %c0_i32_0 = arith.constant 0 : i32
    return %arg0, %c0_i32 : i32, i32
  }
}

</mosaic_0001>

<llo_original>
// kernel: encoder_forward.4
$region0: #{encoder_forward.4}
  #allocation0 [shape = 'u32[]', space=smem, size = 0x4, offset = 0x4, fixed_abs, tag = 'smem constant byte address 0x4 - core index']
  #allocation1 [shape = 'u32[72,128]{1,0:T(1,128)}', space=vmem, size = 0x9000, scoped, tag = 'internal scratch']
  #allocation2 [shape = 'f32[128,128]{1,0:T(8,128)}', space=vmem, size = 0x10000, scoped, tag = 'scratch operand']
  %s0 = inlined_call_operand.vmem [shape: bf16[128,128], index: 0, kind: input, shape index: {}]
  %s1 = inlined_call_operand.vmem [shape: bf16[128,128], index: 1, kind: input, shape index: {}]
  %s2 = inlined_call_operand.vmem [shape: f32[1,128], index: 2, kind: input, shape index: {}]
  %s3 = inlined_call_operand.vmem [shape: bf16[128,128], index: 3, kind: output, shape index: {}]
  %s4 = sld [smem:[#allocation0]]
  $region30: #{encoder_forward.4} parent=0
    _
  %s6 = ssub.s32 1, %s4
  %s7 = scalar_select 0, %s6, %s4
  // Predicated region
  $region2: #{encoder_forward.4} parent=0 // pred_check
    _
  $region3: #{encoder_forward.4} parent=0 // pred_check_branch
    %9 = sbr.rel (0) target = $region5
  $region4: #{encoder_forward.4} parent=0 // pred_region
    _
  $region5: #{encoder_forward.4} parent=0 // pred_fallthru
    _
  // Predicated region
  $region6: #{encoder_forward.4} parent=0 // pred_check
    _
  $region7: #{encoder_forward.4} parent=0 // pred_check_branch
    %11 = sbr.rel (0) target = $region9
  $region8: #{encoder_forward.4} parent=0 // pred_region
    _
  $region9: #{encoder_forward.4} parent=0 // pred_fallthru
    _
  // Predicated region
  $region10: #{encoder_forward.4} parent=0 // pred_check
    _
  $region11: #{encoder_forward.4} parent=0 // pred_check_branch
    %13 = sbr.rel (0) target = $region13
  $region12: #{encoder_forward.4} parent=0 // pred_region
    _
  $region13: #{encoder_forward.4} parent=0 // pred_fallthru
    _
  %p14 = scmp.eq.s32.totalorder 0, 0
  // Predicated region
  $region14: #{encoder_forward.4} parent=0 // pred_check
    %p15 = pneg %p14
  $region15: #{encoder_forward.4} parent=0 // pred_check_branch
    %17 = sbr.rel (%p15) target = $region17
  $region16: #{encoder_forward.4} parent=0 // pred_region
    %18 = vst [vmem:[#allocation2] sm:$0xff] 0.0
    %19 = vst [vmem:[#allocation2 + $0x8] sm:$0xff] 0.0
    %20 = vst [vmem:[#allocation2 + $0x10] sm:$0xff] 0.0
    %21 = vst [vmem:[#allocation2 + $0x18] sm:$0xff] 0.0
    %22 = vst [vmem:[#allocation2 + $0x20] sm:$0xff] 0.0
    %23 = vst [vmem:[#allocation2 + $0x28] sm:$0xff] 0.0
    %24 = vst [vmem:[#allocation2 + $0x30] sm:$0xff] 0.0
    %25 = vst [vmem:[#allocation2 + $0x38] sm:$0xff] 0.0
    %26 = vst [vmem:[#allocation2 + $0x40] sm:$0xff] 0.0
    %27 = vst [vmem:[#allocation2 + $0x48] sm:$0xff] 0.0
    %28 = vst [vmem:[#allocation2 + $0x50] sm:$0xff] 0.0
    %29 = vst [vmem:[#allocation2 + $0x58] sm:$0xff] 0.0
    %30 = vst [vmem:[#allocation2 + $0x60] sm:$0xff] 0.0
    %31 = vst [vmem:[#allocation2 + $0x68] sm:$0xff] 0.0
    %32 = vst [vmem:[#allocation2 + $0x70] sm:$0xff] 0.0
    %33 = vst [vmem:[#allocation2 + $0x78] sm:$0xff] 0.0
  $region17: #{encoder_forward.4} parent=0 // pred_fallthru
    _
  %v34 = vld [vmem:[#allocation2] sm:$0xff]
  %v35 = vld [vmem:[#allocation2 + $0x8] sm:$0xff]
  %v36 = vld [vmem:[#allocation2 + $0x10] sm:$0xff]
  %v37 = vld [vmem:[#allocation2 + $0x18] sm:$0xff]
  %v38 = vld [vmem:[#allocation2 + $0x20] sm:$0xff]
  %v39 = vld [vmem:[#allocation2 + $0x28] sm:$0xff]
  %v40 = vld [vmem:[#allocation2 + $0x30] sm:$0xff]
  %v41 = vld [vmem:[#allocation2 + $0x38] sm:$0xff]
  %v42 = vld [vmem:[#allocation2 + $0x40] sm:$0xff]
  %v43 = vld [vmem:[#allocation2 + $0x48] sm:$0xff]
  %v44 = vld [vmem:[#allocation2 + $0x50] sm:$0xff]
  %v45 = vld [vmem:[#allocation2 + $0x58] sm:$0xff]
  %v46 = vld [vmem:[#allocation2 + $0x60] sm:$0xff]
  %v47 = vld [vmem:[#allocation2 + $0x68] sm:$0xff]
  %v48 = vld [vmem:[#allocation2 + $0x70] sm:$0xff]
  %v49 = vld [vmem:[#allocation2 + $0x78] sm:$0xff]
  %v50 = vld [vmem:[%s0] sm:$0xf]
  %v51 = vld [vmem:[%s0 + $0x4] sm:$0xf]
  %v52 = vld [vmem:[%s0 + $0x8] sm:$0xf]
  %v53 = vld [vmem:[%s0 + $0xc] sm:$0xf]
  %v54 = vld [vmem:[%s0 + $0x10] sm:$0xf]
  %v55 = vld [vmem:[%s0 + $0x14] sm:$0xf]
  %v56 = vld [vmem:[%s0 + $0x18] sm:$0xf]
  %v57 = vld [vmem:[%s0 + $0x1c] sm:$0xf]
  %v58 = vld [vmem:[%s0 + $0x20] sm:$0xf]
  %v59 = vld [vmem:[%s0 + $0x24] sm:$0xf]
  %v60 = vld [vmem:[%s0 + $0x28] sm:$0xf]
  %v61 = vld [vmem:[%s0 + $0x2c] sm:$0xf]
  %v62 = vld [vmem:[%s0 + $0x30] sm:$0xf]
  %v63 = vld [vmem:[%s0 + $0x34] sm:$0xf]
  %v64 = vld [vmem:[%s0 + $0x38] sm:$0xf]
  %v65 = vld [vmem:[%s0 + $0x3c] sm:$0xf]
  %v66 = vld [vmem:[%s1] sm:$0xf]
  %v67 = vld [vmem:[%s1 + $0x4] sm:$0xf]
  %v68 = vld [vmem:[%s1 + $0x8] sm:$0xf]
  %v69 = vld [vmem:[%s1 + $0xc] sm:$0xf]
  %v70 = vld [vmem:[%s1 + $0x10] sm:$0xf]
  %v71 = vld [vmem:[%s1 + $0x14] sm:$0xf]
  %v72 = vld [vmem:[%s1 + $0x18] sm:$0xf]
  %v73 = vld [vmem:[%s1 + $0x1c] sm:$0xf]
  %v74 = vld [vmem:[%s1 + $0x20] sm:$0xf]
  %v75 = vld [vmem:[%s1 + $0x24] sm:$0xf]
  %v76 = vld [vmem:[%s1 + $0x28] sm:$0xf]
  %v77 = vld [vmem:[%s1 + $0x2c] sm:$0xf]
  %v78 = vld [vmem:[%s1 + $0x30] sm:$0xf]
  %v79 = vld [vmem:[%s1 + $0x34] sm:$0xf]
  %v80 = vld [vmem:[%s1 + $0x38] sm:$0xf]
  %v81 = vld [vmem:[%s1 + $0x3c] sm:$0xf]
  %v98 = vunpack.c.l.b16 %v50
  %v99 = vunpack.c.l.b16 %v51
  %v100 = vunpack.c.l.b16 %v52
  %v101 = vunpack.c.l.b16 %v53
  %v102 = vunpack.c.l.b16 %v54
  %v103 = vunpack.c.l.b16 %v55
  %v104 = vunpack.c.l.b16 %v56
  %v105 = vunpack.c.l.b16 %v57
  %v106 = vunpack.c.l.b16 %v58
  %v107 = vunpack.c.l.b16 %v59
  %v108 = vunpack.c.l.b16 %v60
  %v109 = vunpack.c.l.b16 %v61
  %v110 = vunpack.c.l.b16 %v62
  %v111 = vunpack.c.l.b16 %v63
  %v112 = vunpack.c.l.b16 %v64
  %v113 = vunpack.c.l.b16 %v65
  %v114 = vpack.c.b16 %v99, %v98
  %v115 = vpack.c.b16 %v101, %v100
  %v116 = vpack.c.b16 %v103, %v102
  %v117 = vpack.c.b16 %v105, %v104
  %v118 = vpack.c.b16 %v107, %v106
  %v119 = vpack.c.b16 %v109, %v108
  %v120 = vpack.c.b16 %v111, %v110
  %v121 = vpack.c.b16 %v113, %v112
  %v146 = vunpack.c.l.b16 %v66
  %v147 = vunpack.c.l.b16 %v67
  %v148 = vunpack.c.l.b16 %v68
  %v149 = vunpack.c.l.b16 %v69
  %v150 = vunpack.c.l.b16 %v70
  %v151 = vunpack.c.l.b16 %v71
  %v152 = vunpack.c.l.b16 %v72
  %v153 = vunpack.c.l.b16 %v73
  %v154 = vunpack.c.l.b16 %v74
  %v155 = vunpack.c.l.b16 %v75
  %v156 = vunpack.c.l.b16 %v76
  %v157 = vunpack.c.l.b16 %v77
  %v158 = vunpack.c.l.b16 %v78
  %v159 = vunpack.c.l.b16 %v79
  %v160 = vunpack.c.l.b16 %v80
  %v161 = vunpack.c.l.b16 %v81
  %v162 = vpack.c.b16 %v147, %v146
  %v163 = vpack.c.b16 %v149, %v148
  %v164 = vpack.c.b16 %v151, %v150
  %v165 = vpack.c.b16 %v153, %v152
  %v166 = vpack.c.b16 %v155, %v154
  %v167 = vpack.c.b16 %v157, %v156
  %v168 = vpack.c.b16 %v159, %v158
  %v169 = vpack.c.b16 %v161, %v160
  %178 = vmatpush.bf16.msra.mxu0 %v169
  %179 = vmatpush.bf16.msra.mxu0 %v168
  %180 = vmatpush.bf16.msra.mxu0 %v167
  %181 = vmatpush.bf16.msra.mxu0 %v166
  %182 = vmatpush.bf16.msra.mxu0 %v165
  %183 = vmatpush.bf16.msra.mxu0 %v164
  %184 = vmatpush.bf16.msra.mxu0 %v163
  %185 = vmatpush.bf16.msra.mxu0 %v162
  %186 = vmatmul.bf16.gmra.mxu0 %v114
  %v187 = vpop.f32.mrf.mxu0
  %v188 = vadd.f32 0.0, %v187
  %v189 = vpop.f32.mrf.mxu0
  %v190 = vadd.f32 0.0, %v189
  %191 = vmatmul.bf16.gmra.mxu0 %v115
  %v192 = vpop.f32.mrf.mxu0
  %v193 = vadd.f32 0.0, %v192
  %v194 = vpop.f32.mrf.mxu0
  %v195 = vadd.f32 0.0, %v194
  %196 = vmatmul.bf16.gmra.mxu0 %v116
  %v197 = vpop.f32.mrf.mxu0
  %v198 = vadd.f32 0.0, %v197
  %v199 = vpop.f32.mrf.mxu0
  %v200 = vadd.f32 0.0, %v199
  %201 = vmatmul.bf16.gmra.mxu0 %v117
  %v202 = vpop.f32.mrf.mxu0
  %v203 = vadd.f32 0.0, %v202
  %v204 = vpop.f32.mrf.mxu0
  %v205 = vadd.f32 0.0, %v204
  %206 = vmatmul.bf16.gmra.mxu0 %v118
  %v207 = vpop.f32.mrf.mxu0
  %v208 = vadd.f32 0.0, %v207
  %v209 = vpop.f32.mrf.mxu0
  %v210 = vadd.f32 0.0, %v209
  %211 = vmatmul.bf16.gmra.mxu0 %v119
  %v212 = vpop.f32.mrf.mxu0
  %v213 = vadd.f32 0.0, %v212
  %v214 = vpop.f32.mrf.mxu0
  %v215 = vadd.f32 0.0, %v214
  %216 = vmatmul.bf16.gmra.mxu0 %v120
  %v217 = vpop.f32.mrf.mxu0
  %v218 = vadd.f32 0.0, %v217
  %v219 = vpop.f32.mrf.mxu0
  %v220 = vadd.f32 0.0, %v219
  %221 = vmatmul.bf16.gmra.mxu0 %v121
  %v222 = vpop.f32.mrf.mxu0
  %v223 = vadd.f32 0.0, %v222
  %v224 = vpop.f32.mrf.mxu0
  %v225 = vadd.f32 0.0, %v224
  %226 = vdwg.mxu0
  %v227 = vadd.f32 %v34, %v188
  %v228 = vadd.f32 %v35, %v190
  %v229 = vadd.f32 %v36, %v193
  %v230 = vadd.f32 %v37, %v195
  %v231 = vadd.f32 %v38, %v198
  %v232 = vadd.f32 %v39, %v200
  %v233 = vadd.f32 %v40, %v203
  %v234 = vadd.f32 %v41, %v205
  %v235 = vadd.f32 %v42, %v208
  %v236 = vadd.f32 %v43, %v210
  %v237 = vadd.f32 %v44, %v213
  %v238 = vadd.f32 %v45, %v215
  %v239 = vadd.f32 %v46, %v218
  %v240 = vadd.f32 %v47, %v220
  %v241 = vadd.f32 %v48, %v223
  %v242 = vadd.f32 %v49, %v225
  %243 = vst [vmem:[#allocation2] sm:$0xff] %v227
  %244 = vst [vmem:[#allocation2 + $0x8] sm:$0xff] %v228
  %245 = vst [vmem:[#allocation2 + $0x10] sm:$0xff] %v229
  %246 = vst [vmem:[#allocation2 + $0x18] sm:$0xff] %v230
  %247 = vst [vmem:[#allocation2 + $0x20] sm:$0xff] %v231
  %248 = vst [vmem:[#allocation2 + $0x28] sm:$0xff] %v232
  %249 = vst [vmem:[#allocation2 + $0x30] sm:$0xff] %v233
  %250 = vst [vmem:[#allocation2 + $0x38] sm:$0xff] %v234
  %251 = vst [vmem:[#allocation2 + $0x40] sm:$0xff] %v235
  %252 = vst [vmem:[#allocation2 + $0x48] sm:$0xff] %v236
  %253 = vst [vmem:[#allocation2 + $0x50] sm:$0xff] %v237
  %254 = vst [vmem:[#allocation2 + $0x58] sm:$0xff] %v238
  %255 = vst [vmem:[#allocation2 + $0x60] sm:$0xff] %v239
  %256 = vst [vmem:[#allocation2 + $0x68] sm:$0xff] %v240
  %257 = vst [vmem:[#allocation2 + $0x70] sm:$0xff] %v241
  %258 = vst [vmem:[#allocation2 + $0x78] sm:$0xff] %v242
  // Predicated region
  $region18: #{encoder_forward.4} parent=0 // pred_check
    %p259 = pneg %p14
  $region19: #{encoder_forward.4} parent=0 // pred_check_branch
    %261 = sbr.rel (%p259) target = $region21
  $region20: #{encoder_forward.4} parent=0 // pred_region
    %v262 = vld [vmem:[#allocation2] sm:$0xff]
    %v263 = vld [vmem:[#allocation2 + $0x8] sm:$0xff]
    %v264 = vld [vmem:[#allocation2 + $0x10] sm:$0xff]
    %v265 = vld [vmem:[#allocation2 + $0x18] sm:$0xff]
    %v266 = vld [vmem:[#allocation2 + $0x20] sm:$0xff]
    %v267 = vld [vmem:[#allocation2 + $0x28] sm:$0xff]
    %v268 = vld [vmem:[#allocation2 + $0x30] sm:$0xff]
    %v269 = vld [vmem:[#allocation2 + $0x38] sm:$0xff]
    %v270 = vld [vmem:[#allocation2 + $0x40] sm:$0xff]
    %v271 = vld [vmem:[#allocation2 + $0x48] sm:$0xff]
    %v272 = vld [vmem:[#allocation2 + $0x50] sm:$0xff]
    %v273 = vld [vmem:[#allocation2 + $0x58] sm:$0xff]
    %v274 = vld [vmem:[#allocation2 + $0x60] sm:$0xff]
    %v275 = vld [vmem:[#allocation2 + $0x68] sm:$0xff]
    %v276 = vld [vmem:[#allocation2 + $0x70] sm:$0xff]
    %v277 = vld [vmem:[#allocation2 + $0x78] sm:$0xff]
    %v278 = vld [vmem:[%s2] sm:$0x1]
    %v280 = vperm.slane %v278, 0
    %v282 = vadd.f32 %v262, %v280
    %v283 = vadd.f32 %v263, %v280
    %v284 = vadd.f32 %v264, %v280
    %v285 = vadd.f32 %v265, %v280
    %v286 = vadd.f32 %v266, %v280
    %v287 = vadd.f32 %v267, %v280
    %v288 = vadd.f32 %v268, %v280
    %v289 = vadd.f32 %v269, %v280
    %v290 = vadd.f32 %v270, %v280
    %v291 = vadd.f32 %v271, %v280
    %v292 = vadd.f32 %v272, %v280
    %v293 = vadd.f32 %v273, %v280
    %v294 = vadd.f32 %v274, %v280
    %v295 = vadd.f32 %v275, %v280
    %v296 = vadd.f32 %v276, %v280
    %v297 = vadd.f32 %v277, %v280
    %v298 = vmax.f32 %v282, 0.0
    %v299 = vmax.f32 %v283, 0.0
    %v300 = vmax.f32 %v284, 0.0
    %v301 = vmax.f32 %v285, 0.0
    %v302 = vmax.f32 %v286, 0.0
    %v303 = vmax.f32 %v287, 0.0
    %v304 = vmax.f32 %v288, 0.0
    %v305 = vmax.f32 %v289, 0.0
    %v306 = vmax.f32 %v290, 0.0
    %v307 = vmax.f32 %v291, 0.0
    %v308 = vmax.f32 %v292, 0.0
    %v309 = vmax.f32 %v293, 0.0
    %v310 = vmax.f32 %v294, 0.0
    %v311 = vmax.f32 %v295, 0.0
    %v312 = vmax.f32 %v296, 0.0
    %v313 = vmax.f32 %v297, 0.0
    %v314 = vpack.c.bf16 %v298, %v298
    %v315 = vpack.c.bf16 %v299, %v299
    %v316 = vpack.c.bf16 %v300, %v300
    %v317 = vpack.c.bf16 %v301, %v301
    %v318 = vpack.c.bf16 %v302, %v302
    %v319 = vpack.c.bf16 %v303, %v303
    %v320 = vpack.c.bf16 %v304, %v304
    %v321 = vpack.c.bf16 %v305, %v305
    %v322 = vpack.c.bf16 %v306, %v306
    %v323 = vpack.c.bf16 %v307, %v307
    %v324 = vpack.c.bf16 %v308, %v308
    %v325 = vpack.c.bf16 %v309, %v309
    %v326 = vpack.c.bf16 %v310, %v310
    %v327 = vpack.c.bf16 %v311, %v311
    %v328 = vpack.c.bf16 %v312, %v312
    %v329 = vpack.c.bf16 %v313, %v313
    %330 = vst [vmem:[%s3] sm:$0xf] %v314
    %331 = vst [vmem:[%s3 + $0x4] sm:$0xf] %v315
    %332 = vst [vmem:[%s3 + $0x8] sm:$0xf] %v316
    %333 = vst [vmem:[%s3 + $0xc] sm:$0xf] %v317
    %334 = vst [vmem:[%s3 + $0x10] sm:$0xf] %v318
    %335 = vst [vmem:[%s3 + $0x14] sm:$0xf] %v319
    %336 = vst [vmem:[%s3 + $0x18] sm:$0xf] %v320
    %337 = vst [vmem:[%s3 + $0x1c] sm:$0xf] %v321
    %338 = vst [vmem:[%s3 + $0x20] sm:$0xf] %v322
    %339 = vst [vmem:[%s3 + $0x24] sm:$0xf] %v323
    %340 = vst [vmem:[%s3 + $0x28] sm:$0xf] %v324
    %341 = vst [vmem:[%s3 + $0x2c] sm:$0xf] %v325
    %342 = vst [vmem:[%s3 + $0x30] sm:$0xf] %v326
    %343 = vst [vmem:[%s3 + $0x34] sm:$0xf] %v327
    %344 = vst [vmem:[%s3 + $0x38] sm:$0xf] %v328
    %345 = vst [vmem:[%s3 + $0x3c] sm:$0xf] %v329
  $region21: #{encoder_forward.4} parent=0 // pred_fallthru
    _
  // Predicated region
  $region22: #{encoder_forward.4} parent=0 // pred_check
    _
  $region23: #{encoder_forward.4} parent=0 // pred_check_branch
    %347 = sbr.rel (0) target = $region25
  $region24: #{encoder_forward.4} parent=0 // pred_region
    _
  $region25: #{encoder_forward.4} parent=0 // pred_fallthru
    _
  // Predicated region
  $region26: #{encoder_forward.4} parent=0 // pred_check
    _
  $region27: #{encoder_forward.4} parent=0 // pred_check_branch
    %349 = sbr.rel (0) target = $region29
  $region28: #{encoder_forward.4} parent=0 // pred_region
    _
  $region29: #{encoder_forward.4} parent=0 // pred_fallthru
    _

// kernel: encoder_forward.5
$region0: #{encoder_forward.5}
  #allocation0 [shape = 'u32[]', space=smem, size = 0x4, offset = 0x4, fixed_abs, tag = 'smem constant byte address 0x4 - core index']
  #allocation1 [shape = 'u32[72,128]{1,0:T(1,128)}', space=vmem, size = 0x9000, scoped, tag = 'internal scratch']
  #allocation2 [shape = 'f32[32,128]{1,0:T(8,128)}', space=vmem, size = 0x4000, scoped, tag = 'scratch operand']
  %s0 = inlined_call_operand.vmem [shape: bf16[32,256], index: 0, kind: input, shape index: {}]
  %s1 = inlined_call_operand.vmem [shape: bf16[256,128], index: 1, kind: input, shape index: {}]
  %s2 = inlined_call_operand.vmem [shape: f32[1,128], index: 2, kind: input, shape index: {}]
  %s3 = inlined_call_operand.vmem [shape: bf16[32,128], index: 3, kind: output, shape index: {}]
  %s4 = sld [smem:[#allocation0]]
  $region30: #{encoder_forward.5} parent=0
    _
  %s6 = ssub.s32 1, %s4
  %s7 = scalar_select 0, %s6, %s4
  // Predicated region
  $region2: #{encoder_forward.5} parent=0 // pred_check
    _
  $region3: #{encoder_forward.5} parent=0 // pred_check_branch
    %9 = sbr.rel (0) target = $region5
  $region4: #{encoder_forward.5} parent=0 // pred_region
    _
  $region5: #{encoder_forward.5} parent=0 // pred_fallthru
    _
  // Predicated region
  $region6: #{encoder_forward.5} parent=0 // pred_check
    _
  $region7: #{encoder_forward.5} parent=0 // pred_check_branch
    %11 = sbr.rel (0) target = $region9
  $region8: #{encoder_forward.5} parent=0 // pred_region
    _
  $region9: #{encoder_forward.5} parent=0 // pred_fallthru
    _
  // Predicated region
  $region10: #{encoder_forward.5} parent=0 // pred_check
    _
  $region11: #{encoder_forward.5} parent=0 // pred_check_branch
    %13 = sbr.rel (0) target = $region13
  $region12: #{encoder_forward.5} parent=0 // pred_region
    _
  $region13: #{encoder_forward.5} parent=0 // pred_fallthru
    _
  %p14 = scmp.eq.s32.totalorder 0, 0
  // Predicated region
  $region14: #{encoder_forward.5} parent=0 // pred_check
    %p15 = pneg %p14
  $region15: #{encoder_forward.5} parent=0 // pred_check_branch
    %17 = sbr.rel (%p15) target = $region17
  $region16: #{encoder_forward.5} parent=0 // pred_region
    %18 = vst [vmem:[#allocation2] sm:$0xff] 0.0
    %19 = vst [vmem:[#allocation2 + $0x8] sm:$0xff] 0.0
    %20 = vst [vmem:[#allocation2 + $0x10] sm:$0xff] 0.0
    %21 = vst [vmem:[#allocation2 + $0x18] sm:$0xff] 0.0
  $region17: #{encoder_forward.5} parent=0 // pred_fallthru
    _
  %v22 = vld [vmem:[#allocation2] sm:$0xff]
  %v23 = vld [vmem:[#allocation2 + $0x8] sm:$0xff]
  %v24 = vld [vmem:[#allocation2 + $0x10] sm:$0xff]
  %v25 = vld [vmem:[#allocation2 + $0x18] sm:$0xff]
  %v26 = vld [vmem:[%s0] sm:$0xff]
  %v27 = vld [vmem:[%s0 + $0x8] sm:$0xff]
  %v28 = vld [vmem:[%s0 + $0x10] sm:$0xff]
  %v29 = vld [vmem:[%s0 + $0x18] sm:$0xff]
  %v30 = vld [vmem:[%s1] sm:$0xf]
  %v31 = vld [vmem:[%s1 + $0x4] sm:$0xf]
  %v32 = vld [vmem:[%s1 + $0x8] sm:$0xf]
  %v33 = vld [vmem:[%s1 + $0xc] sm:$0xf]
  %v34 = vld [vmem:[%s1 + $0x10] sm:$0xf]
  %v35 = vld [vmem:[%s1 + $0x14] sm:$0xf]
  %v36 = vld [vmem:[%s1 + $0x18] sm:$0xf]
  %v37 = vld [vmem:[%s1 + $0x1c] sm:$0xf]
  %v38 = vld [vmem:[%s1 + $0x20] sm:$0xf]
  %v39 = vld [vmem:[%s1 + $0x24] sm:$0xf]
  %v40 = vld [vmem:[%s1 + $0x28] sm:$0xf]
  %v41 = vld [vmem:[%s1 + $0x2c] sm:$0xf]
  %v42 = vld [vmem:[%s1 + $0x30] sm:$0xf]
  %v43 = vld [vmem:[%s1 + $0x34] sm:$0xf]
  %v44 = vld [vmem:[%s1 + $0x38] sm:$0xf]
  %v45 = vld [vmem:[%s1 + $0x3c] sm:$0xf]
  %v46 = vld [vmem:[%s1 + $0x40] sm:$0xf]
  %v47 = vld [vmem:[%s1 + $0x44] sm:$0xf]
  %v48 = vld [vmem:[%s1 + $0x48] sm:$0xf]
  %v49 = vld [vmem:[%s1 + $0x4c] sm:$0xf]
  %v50 = vld [vmem:[%s1 + $0x50] sm:$0xf]
  %v51 = vld [vmem:[%s1 + $0x54] sm:$0xf]
  %v52 = vld [vmem:[%s1 + $0x58] sm:$0xf]
  %v53 = vld [vmem:[%s1 + $0x5c] sm:$0xf]
  %v54 = vld [vmem:[%s1 + $0x60] sm:$0xf]
  %v55 = vld [vmem:[%s1 + $0x64] sm:$0xf]
  %v56 = vld [vmem:[%s1 + $0x68] sm:$0xf]
  %v57 = vld [vmem:[%s1 + $0x6c] sm:$0xf]
  %v58 = vld [vmem:[%s1 + $0x70] sm:$0xf]
  %v59 = vld [vmem:[%s1 + $0x74] sm:$0xf]
  %v60 = vld [vmem:[%s1 + $0x78] sm:$0xf]
  %v61 = vld [vmem:[%s1 + $0x7c] sm:$0xf]
  %v66 = vunpack.c.l.b16 %v26
  %v67 = vunpack.c.h.b16 %v26
  %v68 = vunpack.c.l.b16 %v27
  %v69 = vunpack.c.h.b16 %v27
  %v70 = vunpack.c.l.b16 %v28
  %v71 = vunpack.c.h.b16 %v28
  %v72 = vunpack.c.l.b16 %v29
  %v73 = vunpack.c.h.b16 %v29
  %v74 = vpack.c.b16 %v68, %v66
  %v75 = vpack.c.b16 %v69, %v67
  %v76 = vpack.c.b16 %v72, %v70
  %v77 = vpack.c.b16 %v73, %v71
  %v114 = vunpack.c.l.b16 %v30
  %v115 = vunpack.c.l.b16 %v31
  %v116 = vunpack.c.l.b16 %v32
  %v117 = vunpack.c.l.b16 %v33
  %v118 = vunpack.c.l.b16 %v34
  %v119 = vunpack.c.l.b16 %v35
  %v120 = vunpack.c.l.b16 %v36
  %v121 = vunpack.c.l.b16 %v37
  %v122 = vunpack.c.l.b16 %v38
  %v123 = vunpack.c.l.b16 %v39
  %v124 = vunpack.c.l.b16 %v40
  %v125 = vunpack.c.l.b16 %v41
  %v126 = vunpack.c.l.b16 %v42
  %v127 = vunpack.c.l.b16 %v43
  %v128 = vunpack.c.l.b16 %v44
  %v129 = vunpack.c.l.b16 %v45
  %v130 = vunpack.c.l.b16 %v46
  %v131 = vunpack.c.l.b16 %v47
  %v132 = vunpack.c.l.b16 %v48
  %v133 = vunpack.c.l.b16 %v49
  %v134 = vunpack.c.l.b16 %v50
  %v135 = vunpack.c.l.b16 %v51
  %v136 = vunpack.c.l.b16 %v52
  %v137 = vunpack.c.l.b16 %v53
  %v138 = vunpack.c.l.b16 %v54
  %v139 = vunpack.c.l.b16 %v55
  %v140 = vunpack.c.l.b16 %v56
  %v141 = vunpack.c.l.b16 %v57
  %v142 = vunpack.c.l.b16 %v58
  %v143 = vunpack.c.l.b16 %v59
  %v144 = vunpack.c.l.b16 %v60
  %v145 = vunpack.c.l.b16 %v61
  %v146 = vpack.c.b16 %v115, %v114
  %v147 = vpack.c.b16 %v117, %v116
  %v148 = vpack.c.b16 %v119, %v118
  %v149 = vpack.c.b16 %v121, %v120
  %v150 = vpack.c.b16 %v123, %v122
  %v151 = vpack.c.b16 %v125, %v124
  %v152 = vpack.c.b16 %v127, %v126
  %v153 = vpack.c.b16 %v129, %v128
  %v154 = vpack.c.b16 %v131, %v130
  %v155 = vpack.c.b16 %v133, %v132
  %v156 = vpack.c.b16 %v135, %v134
  %v157 = vpack.c.b16 %v137, %v136
  %v158 = vpack.c.b16 %v139, %v138
  %v159 = vpack.c.b16 %v141, %v140
  %v160 = vpack.c.b16 %v143, %v142
  %v161 = vpack.c.b16 %v145, %v144
  %178 = vmatpush.bf16.msra.mxu0 %v153
  %179 = vmatpush.bf16.msra.mxu0 %v152
  %180 = vmatpush.bf16.msra.mxu0 %v151
  %181 = vmatpush.bf16.msra.mxu0 %v150
  %182 = vmatpush.bf16.msra.mxu0 %v149
  %183 = vmatpush.bf16.msra.mxu0 %v148
  %184 = vmatpush.bf16.msra.mxu0 %v147
  %185 = vmatpush.bf16.msra.mxu0 %v146
  %186 = vmatmul.bf16.gmra.mxu0 %v74
  %v187 = vpop.f32.mrf.mxu0
  %v188 = vadd.f32 0.0, %v187
  %v189 = vpop.f32.mrf.mxu0
  %v190 = vadd.f32 0.0, %v189
  %191 = vmatmul.bf16.gmra.mxu0 %v76
  %v192 = vpop.f32.mrf.mxu0
  %v193 = vadd.f32 0.0, %v192
  %v194 = vpop.f32.mrf.mxu0
  %v195 = vadd.f32 0.0, %v194
  %196 = vdwg.mxu0
  %197 = vmatpush.bf16.msra.mxu0 %v161
  %198 = vmatpush.bf16.msra.mxu0 %v160
  %199 = vmatpush.bf16.msra.mxu0 %v159
  %200 = vmatpush.bf16.msra.mxu0 %v158
  %201 = vmatpush.bf16.msra.mxu0 %v157
  %202 = vmatpush.bf16.msra.mxu0 %v156
  %203 = vmatpush.bf16.msra.mxu0 %v155
  %204 = vmatpush.bf16.msra.mxu0 %v154
  %205 = vmatmul.bf16.gmra.mxu0 %v75
  %v206 = vpop.f32.mrf.mxu0
  %v207 = vadd.f32 %v188, %v206
  %v208 = vpop.f32.mrf.mxu0
  %v209 = vadd.f32 %v190, %v208
  %210 = vmatmul.bf16.gmra.mxu0 %v77
  %v211 = vpop.f32.mrf.mxu0
  %v212 = vadd.f32 %v193, %v211
  %v213 = vpop.f32.mrf.mxu0
  %v214 = vadd.f32 %v195, %v213
  %215 = vdwg.mxu0
  %v216 = vadd.f32 %v22, %v207
  %v217 = vadd.f32 %v23, %v209
  %v218 = vadd.f32 %v24, %v212
  %v219 = vadd.f32 %v25, %v214
  %220 = vst [vmem:[#allocation2] sm:$0xff] %v216
  %221 = vst [vmem:[#allocation2 + $0x8] sm:$0xff] %v217
  %222 = vst [vmem:[#allocation2 + $0x10] sm:$0xff] %v218
  %223 = vst [vmem:[#allocation2 + $0x18] sm:$0xff] %v219
  // Predicated region
  $region18: #{encoder_forward.5} parent=0 // pred_check
    %p224 = pneg %p14
  $region19: #{encoder_forward.5} parent=0 // pred_check_branch
    %226 = sbr.rel (%p224) target = $region21
  $region20: #{encoder_forward.5} parent=0 // pred_region
    %v227 = vld [vmem:[#allocation2] sm:$0xff]
    %v228 = vld [vmem:[#allocation2 + $0x8] sm:$0xff]
    %v229 = vld [vmem:[#allocation2 + $0x10] sm:$0xff]
    %v230 = vld [vmem:[#allocation2 + $0x18] sm:$0xff]
    %v231 = vld [vmem:[%s2] sm:$0x1]
    %v233 = vperm.slane %v231, 0
    %v235 = vadd.f32 %v227, %v233
    %v236 = vadd.f32 %v228, %v233
    %v237 = vadd.f32 %v229, %v233
    %v238 = vadd.f32 %v230, %v233
    %v239 = vmax.f32 %v235, 0.0
    %v240 = vmax.f32 %v236, 0.0
    %v241 = vmax.f32 %v237, 0.0
    %v242 = vmax.f32 %v238, 0.0
    %v243 = vpack.c.bf16 %v239, %v239
    %v244 = vpack.c.bf16 %v240, %v240
    %v245 = vpack.c.bf16 %v241, %v241
    %v246 = vpack.c.bf16 %v242, %v242
    %247 = vst [vmem:[%s3] sm:$0xf] %v243
    %248 = vst [vmem:[%s3 + $0x4] sm:$0xf] %v244
    %249 = vst [vmem:[%s3 + $0x8] sm:$0xf] %v245
    %250 = vst [vmem:[%s3 + $0xc] sm:$0xf] %v246
  $region21: #{encoder_forward.5} parent=0 // pred_fallthru
    _
  // Predicated region
  $region22: #{encoder_forward.5} parent=0 // pred_check
    _
  $region23: #{encoder_forward.5} parent=0 // pred_check_branch
    %252 = sbr.rel (0) target = $region25
  $region24: #{encoder_forward.5} parent=0 // pred_region
    _
  $region25: #{encoder_forward.5} parent=0 // pred_fallthru
    _
  // Predicated region
  $region26: #{encoder_forward.5} parent=0 // pred_check
    _
  $region27: #{encoder_forward.5} parent=0 // pred_check_branch
    %254 = sbr.rel (0) target = $region29
  $region28: #{encoder_forward.5} parent=0 // pred_region
    _
  $region29: #{encoder_forward.5} parent=0 // pred_fallthru
    _

// kernel: encoder_forward.7
$region0: #{encoder_forward.7}
  #allocation0 [shape = 'u32[]', space=smem, size = 0x4, offset = 0x4, fixed_abs, tag = 'smem constant byte address 0x4 - core index']
  #allocation1 [shape = 'u32[72,128]{1,0:T(1,128)}', space=vmem, size = 0x9000, scoped, tag = 'internal scratch']
  #allocation2 [shape = 'f32[2,128]{1,0:T(2,128)}', space=vmem, size = 0x400, scoped, tag = 'scratch operand']
  %s0 = inlined_call_operand.vmem [shape: bf16[2,128], index: 0, kind: input, shape index: {}]
  %s1 = inlined_call_operand.vmem [shape: bf16[128,128], index: 1, kind: input, shape index: {}]
  %s2 = inlined_call_operand.vmem [shape: f32[1,128], index: 2, kind: input, shape index: {}]
  %s3 = inlined_call_operand.vmem [shape: bf16[128,128], index: 3, kind: input, shape index: {}]
  %s4 = inlined_call_operand.vmem [shape: f32[1,128], index: 4, kind: input, shape index: {}]
  %s5 = inlined_call_operand.hbm [shape: f32[2,128], index: 5, kind: output, shape index: {}]
  %s6 = sld [smem:[#allocation0]]
  $region38: #{encoder_forward.7} parent=0
    _
  %s8 = ssub.s32 1, %s6
  %s9 = scalar_select 0, %s8, %s6
  $region1: #{encoder_forward.7} parent=0
    #allocation3 [shape = 'u8[1024]{0}', space=vmem, size = 0x400, scoped, tag = 'output window, operand 0, single buffered']
    #allocation4 [shape = 's32[1]{0}', space=sflag, size = 0x4, scoped, tag = 'scoped memory for encoder_forward.7']
    %10 = vsyncpa [#allocation4], 0
    // Predicated region
    $region2: #{encoder_forward.7} parent=1 // pred_check
      _
    $region3: #{encoder_forward.7} parent=1 // pred_check_branch
      %12 = sbr.rel (0) target = $region5
    $region4: #{encoder_forward.7} parent=1 // pred_region
      _
    $region5: #{encoder_forward.7} parent=1 // pred_fallthru
      _
    // Predicated region
    $region6: #{encoder_forward.7} parent=1 // pred_check
      _
    $region7: #{encoder_forward.7} parent=1 // pred_check_branch
      %14 = sbr.rel (0) target = $region9
    $region8: #{encoder_forward.7} parent=1 // pred_region
      _
    $region9: #{encoder_forward.7} parent=1 // pred_fallthru
      _
    // Predicated region
    $region10: #{encoder_forward.7} parent=1 // pred_check
      _
    $region11: #{encoder_forward.7} parent=1 // pred_check_branch
      %16 = sbr.rel (0) target = $region13
    $region12: #{encoder_forward.7} parent=1 // pred_region
      _
    $region13: #{encoder_forward.7} parent=1 // pred_fallthru
      _
    // Predicated region
    $region14: #{encoder_forward.7} parent=1 // pred_check
      _
    $region15: #{encoder_forward.7} parent=1 // pred_check_branch
      %18 = sbr.rel (0) target = $region17
    $region16: #{encoder_forward.7} parent=1 // pred_region
      _
    $region17: #{encoder_forward.7} parent=1 // pred_fallthru
      _
    // Predicated region
    $region18: #{encoder_forward.7} parent=1 // pred_check
      _
    $region19: #{encoder_forward.7} parent=1 // pred_check_branch
      %20 = sbr.rel (0) target = $region21
    $region20: #{encoder_forward.7} parent=1 // pred_region
      _
    $region21: #{encoder_forward.7} parent=1 // pred_fallthru
      _
    %p21 = scmp.eq.s32.totalorder 0, 0
    // Predicated region
    $region22: #{encoder_forward.7} parent=1 // pred_check
      %p22 = pneg %p21
    $region23: #{encoder_forward.7} parent=1 // pred_check_branch
      %24 = sbr.rel (%p22) target = $region25
    $region24: #{encoder_forward.7} parent=1 // pred_region
      %25 = vst [vmem:[#allocation2] sm:$0x3] 0.0
    $region25: #{encoder_forward.7} parent=1 // pred_fallthru
      _
    %v26 = vld [vmem:[#allocation2] sm:$0x3]
    %v27 = vld [vmem:[%s0] sm:$0x1]
    %v28 = vld [vmem:[%s1] sm:$0xf]
    %v29 = vld [vmem:[%s1 + $0x4] sm:$0xf]
    %v30 = vld [vmem:[%s1 + $0x8] sm:$0xf]
    %v31 = vld [vmem:[%s1 + $0xc] sm:$0xf]
    %v32 = vld [vmem:[%s1 + $0x10] sm:$0xf]
    %v33 = vld [vmem:[%s1 + $0x14] sm:$0xf]
    %v34 = vld [vmem:[%s1 + $0x18] sm:$0xf]
    %v35 = vld [vmem:[%s1 + $0x1c] sm:$0xf]
    %v36 = vld [vmem:[%s1 + $0x20] sm:$0xf]
    %v37 = vld [vmem:[%s1 + $0x24] sm:$0xf]
    %v38 = vld [vmem:[%s1 + $0x28] sm:$0xf]
    %v39 = vld [vmem:[%s1 + $0x2c] sm:$0xf]
    %v40 = vld [vmem:[%s1 + $0x30] sm:$0xf]
    %v41 = vld [vmem:[%s1 + $0x34] sm:$0xf]
    %v42 = vld [vmem:[%s1 + $0x38] sm:$0xf]
    %v43 = vld [vmem:[%s1 + $0x3c] sm:$0xf]
    %v60 = vunpack.c.l.b16 %v28
    %v61 = vunpack.c.l.b16 %v29
    %v62 = vunpack.c.l.b16 %v30
    %v63 = vunpack.c.l.b16 %v31
    %v64 = vunpack.c.l.b16 %v32
    %v65 = vunpack.c.l.b16 %v33
    %v66 = vunpack.c.l.b16 %v34
    %v67 = vunpack.c.l.b16 %v35
    %v68 = vunpack.c.l.b16 %v36
    %v69 = vunpack.c.l.b16 %v37
    %v70 = vunpack.c.l.b16 %v38
    %v71 = vunpack.c.l.b16 %v39
    %v72 = vunpack.c.l.b16 %v40
    %v73 = vunpack.c.l.b16 %v41
    %v74 = vunpack.c.l.b16 %v42
    %v75 = vunpack.c.l.b16 %v43
    %v76 = vpack.c.b16 %v61, %v60
    %v77 = vpack.c.b16 %v63, %v62
    %v78 = vpack.c.b16 %v65, %v64
    %v79 = vpack.c.b16 %v67, %v66
    %v80 = vpack.c.b16 %v69, %v68
    %v81 = vpack.c.b16 %v71, %v70
    %v82 = vpack.c.b16 %v73, %v72
    %v83 = vpack.c.b16 %v75, %v74
    %92 = vmatpush.bf16.msra.mxu0 %v83
    %93 = vmatpush.bf16.msra.mxu0 %v82
    %94 = vmatpush.bf16.msra.mxu0 %v81
    %95 = vmatpush.bf16.msra.mxu0 %v80
    %96 = vmatpush.bf16.msra.mxu0 %v79
    %97 = vmatpush.bf16.msra.mxu0 %v78
    %98 = vmatpush.bf16.msra.mxu0 %v77
    %99 = vmatpush.bf16.msra.mxu0 %v76
    %100 = vmatmul.bf16.gmra.mxu0 %v27
    %v101 = vpop.f32.mrf.mxu0
    %v102 = vadd.f32 0.0, %v101
    %v103 = vpop.f32.mrf.mxu0
    %104 = vdwg.mxu0
    %v105 = vadd.f32 %v26, %v102
    %106 = vst [vmem:[#allocation2] sm:$0x3] %v105
    // Predicated region
    $region26: #{encoder_forward.7} parent=1 // pred_check
      %p107 = pneg %p21
    $region27: #{encoder_forward.7} parent=1 // pred_check_branch
      %109 = sbr.rel (%p107) target = $region29
    $region28: #{encoder_forward.7} parent=1 // pred_region
      %v110 = vld [vmem:[#allocation2] sm:$0x3]
      %v111 = vld [vmem:[%s2] sm:$0x1]
      %v113 = vperm.slane %v111, 0
      %v115 = vadd.f32 %v110, %v113
      %v116 = vmax.f32 %v115, 0.0
      %v117 = vpack.c.bf16 %v116, %v116
      %v118 = vld [vmem:[%s3] sm:$0xf]
      %v119 = vld [vmem:[%s3 + $0x4] sm:$0xf]
      %v120 = vld [vmem:[%s3 + $0x8] sm:$0xf]
      %v121 = vld [vmem:[%s3 + $0xc] sm:$0xf]
      %v122 = vld [vmem:[%s3 + $0x10] sm:$0xf]
      %v123 = vld [vmem:[%s3 + $0x14] sm:$0xf]
      %v124 = vld [vmem:[%s3 + $0x18] sm:$0xf]
      %v125 = vld [vmem:[%s3 + $0x1c] sm:$0xf]
      %v126 = vld [vmem:[%s3 + $0x20] sm:$0xf]
      %v127 = vld [vmem:[%s3 + $0x24] sm:$0xf]
      %v128 = vld [vmem:[%s3 + $0x28] sm:$0xf]
      %v129 = vld [vmem:[%s3 + $0x2c] sm:$0xf]
      %v130 = vld [vmem:[%s3 + $0x30] sm:$0xf]
      %v131 = vld [vmem:[%s3 + $0x34] sm:$0xf]
      %v132 = vld [vmem:[%s3 + $0x38] sm:$0xf]
      %v133 = vld [vmem:[%s3 + $0x3c] sm:$0xf]
      %v134 = vld [vmem:[%s4] sm:$0x1]
      %v136 = vperm.slane %v134, 0
      %v154 = vunpack.c.l.b16 %v118
      %v155 = vunpack.c.l.b16 %v119
      %v156 = vunpack.c.l.b16 %v120
      %v157 = vunpack.c.l.b16 %v121
      %v158 = vunpack.c.l.b16 %v122
      %v159 = vunpack.c.l.b16 %v123
      %v160 = vunpack.c.l.b16 %v124
      %v161 = vunpack.c.l.b16 %v125
      %v162 = vunpack.c.l.b16 %v126
      %v163 = vunpack.c.l.b16 %v127
      %v164 = vunpack.c.l.b16 %v128
      %v165 = vunpack.c.l.b16 %v129
      %v166 = vunpack.c.l.b16 %v130
      %v167 = vunpack.c.l.b16 %v131
      %v168 = vunpack.c.l.b16 %v132
      %v169 = vunpack.c.l.b16 %v133
      %v170 = vpack.c.b16 %v155, %v154
      %v171 = vpack.c.b16 %v157, %v156
      %v172 = vpack.c.b16 %v159, %v158
      %v173 = vpack.c.b16 %v161, %v160
      %v174 = vpack.c.b16 %v163, %v162
      %v175 = vpack.c.b16 %v165, %v164
      %v176 = vpack.c.b16 %v167, %v166
      %v177 = vpack.c.b16 %v169, %v168
      %186 = vmatpush.bf16.msra.mxu0 %v177
      %187 = vmatpush.bf16.msra.mxu0 %v176
      %188 = vmatpush.bf16.msra.mxu0 %v175
      %189 = vmatpush.bf16.msra.mxu0 %v174
      %190 = vmatpush.bf16.msra.mxu0 %v173
      %191 = vmatpush.bf16.msra.mxu0 %v172
      %192 = vmatpush.bf16.msra.mxu0 %v171
      %193 = vmatpush.bf16.msra.mxu0 %v170
      %194 = vmatmul.bf16.gmra.mxu0 %v117
      %v195 = vpop.f32.mrf.mxu0
      %v196 = vadd.f32 %v136, %v195
      %v197 = vpop.f32.mrf.mxu0
      %198 = vdwg.mxu0
      %199 = vst [vmem:[#allocation3] sm:$0x3] %v196
    $region29: #{encoder_forward.7} parent=1 // pred_fallthru
      _
    // Predicated region
    $region30: #{encoder_forward.7} parent=1 // pred_check
      _
    $region31: #{encoder_forward.7} parent=1 // pred_check_branch
      %201 = sbr.rel (0) target = $region33
    $region32: #{encoder_forward.7} parent=1 // pred_region
      %203 = vsyncadd [#allocation4], 0
      %s205 = sshll.u32 [#allocation3], 4
      %s206 = int_to_ptr.vmem [resolvable:$true] %s205
      %s207 = sshll.u32 %s5, 4
      %s208 = int_to_ptr.hbm [resolvable:$true] %s207
      %210 = dma.vmem_to_hbm [thread:$0]  %s206, 32, %s208, [#allocation4]
    $region33: #{encoder_forward.7} parent=1 // pred_fallthru
      _
    // Predicated region
    $region34: #{encoder_forward.7} parent=1 // pred_check
      _
    $region35: #{encoder_forward.7} parent=1 // pred_check_branch
      %212 = sbr.rel (0) target = $region37
    $region36: #{encoder_forward.7} parent=1 // pred_region
      %214 = dma.done [#allocation4], 32
    $region37: #{encoder_forward.7} parent=1 // pred_fallthru
      _
    %215 = vsyncpa [#allocation4], 1

// kernel: encoder_forward.6
$region0: #{encoder_forward.6}
  #allocation0 [shape = 'u32[]', space=smem, size = 0x4, offset = 0x4, fixed_abs, tag = 'smem constant byte address 0x4 - core index']
  #allocation1 [shape = 'u32[72,128]{1,0:T(1,128)}', space=vmem, size = 0x9000, scoped, tag = 'internal scratch']
  #allocation2 [shape = 'f32[8,128]{1,0:T(8,128)}', space=vmem, size = 0x1000, scoped, tag = 'scratch operand']
  %s0 = inlined_call_operand.vmem [shape: bf16[8,512], index: 0, kind: input, shape index: {}]
  %s1 = inlined_call_operand.vmem [shape: bf16[512,128], index: 1, kind: input, shape index: {}]
  %s2 = inlined_call_operand.vmem [shape: f32[1,128], index: 2, kind: input, shape index: {}]
  %s3 = inlined_call_operand.vmem [shape: bf16[8,128], index: 3, kind: output, shape index: {}]
  %s4 = sld [smem:[#allocation0]]
  $region30: #{encoder_forward.6} parent=0
    _
  %s6 = ssub.s32 1, %s4
  %s7 = scalar_select 0, %s6, %s4
  // Predicated region
  $region2: #{encoder_forward.6} parent=0 // pred_check
    _
  $region3: #{encoder_forward.6} parent=0 // pred_check_branch
    %9 = sbr.rel (0) target = $region5
  $region4: #{encoder_forward.6} parent=0 // pred_region
    _
  $region5: #{encoder_forward.6} parent=0 // pred_fallthru
    _
  // Predicated region
  $region6: #{encoder_forward.6} parent=0 // pred_check
    _
  $region7: #{encoder_forward.6} parent=0 // pred_check_branch
    %11 = sbr.rel (0) target = $region9
  $region8: #{encoder_forward.6} parent=0 // pred_region
    _
  $region9: #{encoder_forward.6} parent=0 // pred_fallthru
    _
  // Predicated region
  $region10: #{encoder_forward.6} parent=0 // pred_check
    _
  $region11: #{encoder_forward.6} parent=0 // pred_check_branch
    %13 = sbr.rel (0) target = $region13
  $region12: #{encoder_forward.6} parent=0 // pred_region
    _
  $region13: #{encoder_forward.6} parent=0 // pred_fallthru
    _
  %p14 = scmp.eq.s32.totalorder 0, 0
  // Predicated region
  $region14: #{encoder_forward.6} parent=0 // pred_check
    %p15 = pneg %p14
  $region15: #{encoder_forward.6} parent=0 // pred_check_branch
    %17 = sbr.rel (%p15) target = $region17
  $region16: #{encoder_forward.6} parent=0 // pred_region
    %18 = vst [vmem:[#allocation2] sm:$0xff] 0.0
  $region17: #{encoder_forward.6} parent=0 // pred_fallthru
    _
  %v19 = vld [vmem:[#allocation2] sm:$0xff]
  %v20 = vld [vmem:[%s0] sm:$0xff]
  %v21 = vld [vmem:[%s0 + $0x8] sm:$0xff]
  %v22 = vld [vmem:[%s1] sm:$0xf]
  %v23 = vld [vmem:[%s1 + $0x4] sm:$0xf]
  %v24 = vld [vmem:[%s1 + $0x8] sm:$0xf]
  %v25 = vld [vmem:[%s1 + $0xc] sm:$0xf]
  %v26 = vld [vmem:[%s1 + $0x10] sm:$0xf]
  %v27 = vld [vmem:[%s1 + $0x14] sm:$0xf]
  %v28 = vld [vmem:[%s1 + $0x18] sm:$0xf]
  %v29 = vld [vmem:[%s1 + $0x1c] sm:$0xf]
  %v30 = vld [vmem:[%s1 + $0x20] sm:$0xf]
  %v31 = vld [vmem:[%s1 + $0x24] sm:$0xf]
  %v32 = vld [vmem:[%s1 + $0x28] sm:$0xf]
  %v33 = vld [vmem:[%s1 + $0x2c] sm:$0xf]
  %v34 = vld [vmem:[%s1 + $0x30] sm:$0xf]
  %v35 = vld [vmem:[%s1 + $0x34] sm:$0xf]
  %v36 = vld [vmem:[%s1 + $0x38] sm:$0xf]
  %v37 = vld [vmem:[%s1 + $0x3c] sm:$0xf]
  %v38 = vld [vmem:[%s1 + $0x40] sm:$0xf]
  %v39 = vld [vmem:[%s1 + $0x44] sm:$0xf]
  %v40 = vld [vmem:[%s1 + $0x48] sm:$0xf]
  %v41 = vld [vmem:[%s1 + $0x4c] sm:$0xf]
  %v42 = vld [vmem:[%s1 + $0x50] sm:$0xf]
  %v43 = vld [vmem:[%s1 + $0x54] sm:$0xf]
  %v44 = vld [vmem:[%s1 + $0x58] sm:$0xf]
  %v45 = vld [vmem:[%s1 + $0x5c] sm:$0xf]
  %v46 = vld [vmem:[%s1 + $0x60] sm:$0xf]
  %v47 = vld [vmem:[%s1 + $0x64] sm:$0xf]
  %v48 = vld [vmem:[%s1 + $0x68] sm:$0xf]
  %v49 = vld [vmem:[%s1 + $0x6c] sm:$0xf]
  %v50 = vld [vmem:[%s1 + $0x70] sm:$0xf]
  %v51 = vld [vmem:[%s1 + $0x74] sm:$0xf]
  %v52 = vld [vmem:[%s1 + $0x78] sm:$0xf]
  %v53 = vld [vmem:[%s1 + $0x7c] sm:$0xf]
  %v54 = vld [vmem:[%s1 + $0x80] sm:$0xf]
  %v55 = vld [vmem:[%s1 + $0x84] sm:$0xf]
  %v56 = vld [vmem:[%s1 + $0x88] sm:$0xf]
  %v57 = vld [vmem:[%s1 + $0x8c] sm:$0xf]
  %v58 = vld [vmem:[%s1 + $0x90] sm:$0xf]
  %v59 = vld [vmem:[%s1 + $0x94] sm:$0xf]
  %v60 = vld [vmem:[%s1 + $0x98] sm:$0xf]
  %v61 = vld [vmem:[%s1 + $0x9c] sm:$0xf]
  %v62 = vld [vmem:[%s1 + $0xa0] sm:$0xf]
  %v63 = vld [vmem:[%s1 + $0xa4] sm:$0xf]
  %v64 = vld [vmem:[%s1 + $0xa8] sm:$0xf]
  %v65 = vld [vmem:[%s1 + $0xac] sm:$0xf]
  %v66 = vld [vmem:[%s1 + $0xb0] sm:$0xf]
  %v67 = vld [vmem:[%s1 + $0xb4] sm:$0xf]
  %v68 = vld [vmem:[%s1 + $0xb8] sm:$0xf]
  %v69 = vld [vmem:[%s1 + $0xbc] sm:$0xf]
  %v70 = vld [vmem:[%s1 + $0xc0] sm:$0xf]
  %v71 = vld [vmem:[%s1 + $0xc4] sm:$0xf]
  %v72 = vld [vmem:[%s1 + $0xc8] sm:$0xf]
  %v73 = vld [vmem:[%s1 + $0xcc] sm:$0xf]
  %v74 = vld [vmem:[%s1 + $0xd0] sm:$0xf]
  %v75 = vld [vmem:[%s1 + $0xd4] sm:$0xf]
  %v76 = vld [vmem:[%s1 + $0xd8] sm:$0xf]
  %v77 = vld [vmem:[%s1 + $0xdc] sm:$0xf]
  %v78 = vld [vmem:[%s1 + $0xe0] sm:$0xf]
  %v79 = vld [vmem:[%s1 + $0xe4] sm:$0xf]
  %v80 = vld [vmem:[%s1 + $0xe8] sm:$0xf]
  %v81 = vld [vmem:[%s1 + $0xec] sm:$0xf]
  %v82 = vld [vmem:[%s1 + $0xf0] sm:$0xf]
  %v83 = vld [vmem:[%s1 + $0xf4] sm:$0xf]
  %v84 = vld [vmem:[%s1 + $0xf8] sm:$0xf]
  %v85 = vld [vmem:[%s1 + $0xfc] sm:$0xf]
  %v88 = vunpack.c.l.b16 %v20
  %v89 = vunpack.c.h.b16 %v20
  %v90 = vunpack.c.l.b16 %v21
  %v91 = vunpack.c.h.b16 %v21
  %v92 = vpack.c.b16 %v88, %v88
  %v93 = vpack.c.b16 %v89, %v89
  %v94 = vpack.c.b16 %v90, %v90
  %v95 = vpack.c.b16 %v91, %v91
  %v164 = vunpack.c.l.b16 %v22
  %v165 = vunpack.c.l.b16 %v23
  %v166 = vunpack.c.l.b16 %v24
  %v167 = vunpack.c.l.b16 %v25
  %v168 = vunpack.c.l.b16 %v26
  %v169 = vunpack.c.l.b16 %v27
  %v170 = vunpack.c.l.b16 %v28
  %v171 = vunpack.c.l.b16 %v29
  %v172 = vunpack.c.l.b16 %v30
  %v173 = vunpack.c.l.b16 %v31
  %v174 = vunpack.c.l.b16 %v32
  %v175 = vunpack.c.l.b16 %v33
  %v176 = vunpack.c.l.b16 %v34
  %v177 = vunpack.c.l.b16 %v35
  %v178 = vunpack.c.l.b16 %v36
  %v179 = vunpack.c.l.b16 %v37
  %v180 = vunpack.c.l.b16 %v38
  %v181 = vunpack.c.l.b16 %v39
  %v182 = vunpack.c.l.b16 %v40
  %v183 = vunpack.c.l.b16 %v41
  %v184 = vunpack.c.l.b16 %v42
  %v185 = vunpack.c.l.b16 %v43
  %v186 = vunpack.c.l.b16 %v44
  %v187 = vunpack.c.l.b16 %v45
  %v188 = vunpack.c.l.b16 %v46
  %v189 = vunpack.c.l.b16 %v47
  %v190 = vunpack.c.l.b16 %v48
  %v191 = vunpack.c.l.b16 %v49
  %v192 = vunpack.c.l.b16 %v50
  %v193 = vunpack.c.l.b16 %v51
  %v194 = vunpack.c.l.b16 %v52
  %v195 = vunpack.c.l.b16 %v53
  %v196 = vunpack.c.l.b16 %v54
  %v197 = vunpack.c.l.b16 %v55
  %v198 = vunpack.c.l.b16 %v56
  %v199 = vunpack.c.l.b16 %v57
  %v200 = vunpack.c.l.b16 %v58
  %v201 = vunpack.c.l.b16 %v59
  %v202 = vunpack.c.l.b16 %v60
  %v203 = vunpack.c.l.b16 %v61
  %v204 = vunpack.c.l.b16 %v62
  %v205 = vunpack.c.l.b16 %v63
  %v206 = vunpack.c.l.b16 %v64
  %v207 = vunpack.c.l.b16 %v65
  %v208 = vunpack.c.l.b16 %v66
  %v209 = vunpack.c.l.b16 %v67
  %v210 = vunpack.c.l.b16 %v68
  %v211 = vunpack.c.l.b16 %v69
  %v212 = vunpack.c.l.b16 %v70
  %v213 = vunpack.c.l.b16 %v71
  %v214 = vunpack.c.l.b16 %v72
  %v215 = vunpack.c.l.b16 %v73
  %v216 = vunpack.c.l.b16 %v74
  %v217 = vunpack.c.l.b16 %v75
  %v218 = vunpack.c.l.b16 %v76
  %v219 = vunpack.c.l.b16 %v77
  %v220 = vunpack.c.l.b16 %v78
  %v221 = vunpack.c.l.b16 %v79
  %v222 = vunpack.c.l.b16 %v80
  %v223 = vunpack.c.l.b16 %v81
  %v224 = vunpack.c.l.b16 %v82
  %v225 = vunpack.c.l.b16 %v83
  %v226 = vunpack.c.l.b16 %v84
  %v227 = vunpack.c.l.b16 %v85
  %v228 = vpack.c.b16 %v165, %v164
  %v229 = vpack.c.b16 %v167, %v166
  %v230 = vpack.c.b16 %v169, %v168
  %v231 = vpack.c.b16 %v171, %v170
  %v232 = vpack.c.b16 %v173, %v172
  %v233 = vpack.c.b16 %v175, %v174
  %v234 = vpack.c.b16 %v177, %v176
  %v235 = vpack.c.b16 %v179, %v178
  %v236 = vpack.c.b16 %v181, %v180
  %v237 = vpack.c.b16 %v183, %v182
  %v238 = vpack.c.b16 %v185, %v184
  %v239 = vpack.c.b16 %v187, %v186
  %v240 = vpack.c.b16 %v189, %v188
  %v241 = vpack.c.b16 %v191, %v190
  %v242 = vpack.c.b16 %v193, %v192
  %v243 = vpack.c.b16 %v195, %v194
  %v244 = vpack.c.b16 %v197, %v196
  %v245 = vpack.c.b16 %v199, %v198
  %v246 = vpack.c.b16 %v201, %v200
  %v247 = vpack.c.b16 %v203, %v202
  %v248 = vpack.c.b16 %v205, %v204
  %v249 = vpack.c.b16 %v207, %v206
  %v250 = vpack.c.b16 %v209, %v208
  %v251 = vpack.c.b16 %v211, %v210
  %v252 = vpack.c.b16 %v213, %v212
  %v253 = vpack.c.b16 %v215, %v214
  %v254 = vpack.c.b16 %v217, %v216
  %v255 = vpack.c.b16 %v219, %v218
  %v256 = vpack.c.b16 %v221, %v220
  %v257 = vpack.c.b16 %v223, %v222
  %v258 = vpack.c.b16 %v225, %v224
  %v259 = vpack.c.b16 %v227, %v226
  %292 = vmatpush.bf16.msra.mxu0 %v235
  %293 = vmatpush.bf16.msra.mxu0 %v234
  %294 = vmatpush.bf16.msra.mxu0 %v233
  %295 = vmatpush.bf16.msra.mxu0 %v232
  %296 = vmatpush.bf16.msra.mxu0 %v231
  %297 = vmatpush.bf16.msra.mxu0 %v230
  %298 = vmatpush.bf16.msra.mxu0 %v229
  %299 = vmatpush.bf16.msra.mxu0 %v228
  %300 = vmatmul.bf16.gmra.mxu0 %v92
  %v301 = vpop.f32.mrf.mxu0
  %v302 = vadd.f32 0.0, %v301
  %v303 = vpop.f32.mrf.mxu0
  %304 = vdwg.mxu0
  %305 = vmatpush.bf16.msra.mxu0 %v243
  %306 = vmatpush.bf16.msra.mxu0 %v242
  %307 = vmatpush.bf16.msra.mxu0 %v241
  %308 = vmatpush.bf16.msra.mxu0 %v240
  %309 = vmatpush.bf16.msra.mxu0 %v239
  %310 = vmatpush.bf16.msra.mxu0 %v238
  %311 = vmatpush.bf16.msra.mxu0 %v237
  %312 = vmatpush.bf16.msra.mxu0 %v236
  %313 = vmatmul.bf16.gmra.mxu0 %v93
  %v314 = vpop.f32.mrf.mxu0
  %v315 = vadd.f32 %v302, %v314
  %v316 = vpop.f32.mrf.mxu0
  %317 = vdwg.mxu0
  %318 = vmatpush.bf16.msra.mxu0 %v251
  %319 = vmatpush.bf16.msra.mxu0 %v250
  %320 = vmatpush.bf16.msra.mxu0 %v249
  %321 = vmatpush.bf16.msra.mxu0 %v248
  %322 = vmatpush.bf16.msra.mxu0 %v247
  %323 = vmatpush.bf16.msra.mxu0 %v246
  %324 = vmatpush.bf16.msra.mxu0 %v245
  %325 = vmatpush.bf16.msra.mxu0 %v244
  %326 = vmatmul.bf16.gmra.mxu0 %v94
  %v327 = vpop.f32.mrf.mxu0
  %v328 = vadd.f32 %v315, %v327
  %v329 = vpop.f32.mrf.mxu0
  %330 = vdwg.mxu0
  %331 = vmatpush.bf16.msra.mxu0 %v259
  %332 = vmatpush.bf16.msra.mxu0 %v258
  %333 = vmatpush.bf16.msra.mxu0 %v257
  %334 = vmatpush.bf16.msra.mxu0 %v256
  %335 = vmatpush.bf16.msra.mxu0 %v255
  %336 = vmatpush.bf16.msra.mxu0 %v254
  %337 = vmatpush.bf16.msra.mxu0 %v253
  %338 = vmatpush.bf16.msra.mxu0 %v252
  %339 = vmatmul.bf16.gmra.mxu0 %v95
  %v340 = vpop.f32.mrf.mxu0
  %v341 = vadd.f32 %v328, %v340
  %v342 = vpop.f32.mrf.mxu0
  %343 = vdwg.mxu0
  %v344 = vadd.f32 %v19, %v341
  %345 = vst [vmem:[#allocation2] sm:$0xff] %v344
  // Predicated region
  $region18: #{encoder_forward.6} parent=0 // pred_check
    %p346 = pneg %p14
  $region19: #{encoder_forward.6} parent=0 // pred_check_branch
    %348 = sbr.rel (%p346) target = $region21
  $region20: #{encoder_forward.6} parent=0 // pred_region
    %v349 = vld [vmem:[#allocation2] sm:$0xff]
    %v350 = vld [vmem:[%s2] sm:$0x1]
    %v352 = vperm.slane %v350, 0
    %v354 = vadd.f32 %v349, %v352
    %v355 = vmax.f32 %v354, 0.0
    %v356 = vpack.c.bf16 %v355, %v355
    %357 = vst [vmem:[%s3] sm:$0xf] %v356
  $region21: #{encoder_forward.6} parent=0 // pred_fallthru
    _
  // Predicated region
  $region22: #{encoder_forward.6} parent=0 // pred_check
    _
  $region23: #{encoder_forward.6} parent=0 // pred_check_branch
    %359 = sbr.rel (0) target = $region25
  $region24: #{encoder_forward.6} parent=0 // pred_region
    _
  $region25: #{encoder_forward.6} parent=0 // pred_fallthru
    _
  // Predicated region
  $region26: #{encoder_forward.6} parent=0 // pred_check
    _
  $region27: #{encoder_forward.6} parent=0 // pred_check_branch
    %361 = sbr.rel (0) target = $region29
  $region28: #{encoder_forward.6} parent=0 // pred_region
    _
  $region29: #{encoder_forward.6} parent=0 // pred_fallthru
    _

</llo_original>
